<compile_context>
chip_gen: v7x
topology: tpu7x:2x2x1
jax: 0.10.0
libtpu: 0.0.40
codegen_flags: <defaults>
</compile_context>

<pallas_src>
import functools

import numpy as np
import jax
import jax.numpy as jnp
from jax import lax
from jax.experimental import pallas as pl
from jax.experimental.pallas import tpu as pltpu

T = 256          # number of marching-cubes topologies
SUB_M = 128      # rows per inner compute chunk (multiple of 8, lane-friendly)
DEFAULT_TILE_M = 1024


def _round_up(x, m):
    return ((x + m - 1) // m) * m


def _make_kernel(sub, n_sub):
    """Build the kernel for a given inner-chunk size / trip count."""

    def kernel(corners_ref, out_ref):
        # corners_ref: (8, TILE_M) corner-major occupancies for TILE_M cells.
        # out_ref:     (TILE_M, 256) topology probabilities.
        t_idx = lax.broadcasted_iota(jnp.int32, (1, T), 1)          # (1, 256)
        # bits[v][0, t] == True  iff  (t >> v) & 1  (hoisted, tiny int ops).
        bits = [(t_idx & (1 << v)) != 0 for v in range(8)]

        def body(s, carry):
            r0 = pl.multiple_of(s * sub, sub)
            c = corners_ref[:, pl.ds(r0, sub)].T                    # (sub, 8)
            not_c = 1.0 - c                                         # hoisted
            # Product over the 8 corners: one select + one multiply per corner
            # at full (sub, 256) width.
            acc = jnp.where(bits[0], c[:, 0:1], not_c[:, 0:1])
            for v in range(1, 8):
                acc = acc * jnp.where(bits[v], c[:, v:v + 1], not_c[:, v:v + 1])
            out_ref[pl.ds(r0, sub), :] = acc
            return carry

        lax.fori_loop(0, n_sub, body, 0)

    return kernel


@functools.partial(jax.jit, static_argnames=("tile_m",))
def occupancy_to_topology(occupancy, tile_m=DEFAULT_TILE_M):
    """Pallas implementation of OccupancyToTopology.forward.

    occupancy: [W+1, H+1, D+1] float array.
    returns:   [W*H*D, 256] float32.
    """
    occupancy = occupancy.astype(jnp.float32)
    Wp, Hp, Dp = occupancy.shape
    W, H, D = Wp - 1, Hp - 1, Dp - 1
    N = W * H * D

    # ---- glue: gather the 8 corner occupancies, corner-major (8, N) ----
    o = occupancy
    corner_offsets = [(0, 0, 1), (1, 0, 1), (1, 0, 0), (0, 0, 0),
                      (0, 1, 1), (1, 1, 1), (1, 1, 0), (0, 1, 0)]
    corners = jnp.stack(
        [o[dx:dx + W, dy:dy + H, dz:dz + D].reshape(N)
         for (dx, dy, dz) in corner_offsets],
        axis=0,
    )  # (8, N), cell index = i*H*D + j*D + k ; only ~32 B/cell in HBM.

    # ---- tile-size selection ----
    if N <= SUB_M:
        # Single block covering everything; block dims equal the (padded)
        # array dims so the (8,128) constraint is trivially satisfied.
        tile_m_eff = _round_up(max(N, 8), 8)
        sub = tile_m_eff
    else:
        # Multiple of 128 (lane dim of the corners block); big enough to
        # amortize per-step pipeline overhead, small enough to keep >= ~4 grid
        # steps so both TensorCores stay busy on megacore parts.
        tile_m_eff = max(SUB_M, min(_round_up(tile_m, SUB_M),
                                    _round_up(pl.cdiv(N, 4), SUB_M)))
        sub = SUB_M
    n_sub = tile_m_eff // sub

    grid_m = pl.cdiv(N, tile_m_eff)
    n_pad = grid_m * tile_m_eff
    if n_pad != N:
        # Pad only the cheap input; the output keeps its exact (N, 256) shape
        # and Pallas clips the final partial block on writeback.
        corners = jnp.pad(corners, ((0, 0), (0, n_pad - N)))

    kernel = _make_kernel(sub, n_sub)
    out = pl.pallas_call(
        kernel,
        out_shape=jax.ShapeDtypeStruct((N, T), jnp.float32),
        grid_spec=pltpu.PrefetchScalarGridSpec(
            num_scalar_prefetch=0,
            grid=(grid_m,),
            in_specs=[
                pl.BlockSpec((8, tile_m_eff), lambda i: (0, i)),   # corners
            ],
            out_specs=pl.BlockSpec((tile_m_eff, T), lambda i: (i, 0)),
        ),
        compiler_params=pltpu.CompilerParams(
            dimension_semantics=("parallel",)),
    )(corners)
    return out


def _reference(occupancy):
    """Pure-JAX reference for correctness checking."""
    occupancy = occupancy.astype(jnp.float32)
    Wp, Hp, Dp = occupancy.shape
    W, H, D = Wp - 1, Hp - 1, Dp - 1
    N = W * H * D
    o = occupancy
    corner_offsets = [(0, 0, 1), (1, 0, 1), (1, 0, 0), (0, 0, 0),
                      (0, 1, 1), (1, 1, 1), (1, 1, 0), (0, 1, 0)]
    corners = jnp.stack(
        [o[dx:dx + W, dy:dy + H, dz:dz + D].reshape(N)
         for (dx, dy, dz) in corner_offsets],
        axis=-1,
    )  # (N, 8)
    t_idx = np.arange(T)
    bits = jnp.asarray(
        np.stack([(t_idx >> v) & 1 for v in range(8)], axis=0),
        dtype=jnp.float32)                       # (8, 256)
    c = corners[:, :, None]                      # (N, 8, 1)
    b = bits[None, :, :]                         # (1, 8, 256)
    terms = b * c + (1.0 - b) * (1.0 - c)
    return jnp.prod(terms, axis=1)               # (N, 256)


if __name__ == "__main__":
    key = jax.random.PRNGKey(0)
    k_small, k_big = jax.random.split(key)

    # Small case: (W+1,H+1,D+1) = (9,9,9) -> 512 cells, output (512, 256).
    occ_small = jax.random.uniform(k_small, (9, 9, 9), dtype=jnp.float32)
    topo = jax.block_until_ready(occupancy_to_topology(occ_small))
    ref = jax.block_until_ready(_reference(occ_small))
    assert topo.shape == (8 * 8 * 8, 256), topo.shape
    assert topo.dtype == jnp.float32
    np.testing.assert_allclose(np.asarray(topo), np.asarray(ref),
                               rtol=1e-5, atol=1e-6)

    # Slightly larger case: exercises the big-tile + inner sub-loop path
    # (16^3 = 4096 cells -> tile_m = 1024, grid of 4, 8 inner chunks).
    occ_big = jax.random.uniform(k_big, (17, 17, 17), dtype=jnp.float32)
    topo_b = jax.block_until_ready(occupancy_to_topology(occ_big))
    ref_b = jax.block_until_ready(_reference(occ_big))
    assert topo_b.shape == (16 * 16 * 16, 256), topo_b.shape
    np.testing.assert_allclose(np.asarray(topo_b), np.asarray(ref_b),
                               rtol=1e-5, atol=1e-6)

    print("KERNEL_OK")
</pallas_src>

<mosaic_0001>
module attributes {stable_mosaic.version = 11 : i64} {
  func.func @kernel(%arg0: i32, %arg1: memref<8x128xf32, #tpu.memory_space<vmem>>, %arg2: memref<128x256xf32, #tpu.memory_space<vmem>>) attributes {dimension_semantics = [#tpu.dimension_semantics<parallel>], iteration_bounds = array<i64: 4>, scalar_prefetch = 0 : i64, scratch_operands = 0 : i64, tpu.core_type = #tpu.core_type<tc>, window_params = [{transform_indices = @transform_0, window_bounds = array<i64: 8, 128>}, {transform_indices = @transform_1, window_bounds = array<i64: 128, 256>}]} {
    %0 = tpu.iota {dimensions = array<i32: 1>} : vector<1x256xi32>
    %c1_i32 = arith.constant 1 : i32
    %1 = vector.broadcast %c1_i32 : i32 to vector<1x256xi32>
    %2 = arith.andi %0, %1 : vector<1x256xi32>
    %c0_i32 = arith.constant 0 : i32
    %3 = vector.broadcast %c0_i32 : i32 to vector<1x256xi32>
    %4 = arith.cmpi ne, %2, %3 : vector<1x256xi32>
    %c2_i32 = arith.constant 2 : i32
    %5 = vector.broadcast %c2_i32 : i32 to vector<1x256xi32>
    %6 = arith.andi %0, %5 : vector<1x256xi32>
    %c0_i32_0 = arith.constant 0 : i32
    %7 = vector.broadcast %c0_i32_0 : i32 to vector<1x256xi32>
    %8 = arith.cmpi ne, %6, %7 : vector<1x256xi32>
    %c4_i32 = arith.constant 4 : i32
    %9 = vector.broadcast %c4_i32 : i32 to vector<1x256xi32>
    %10 = arith.andi %0, %9 : vector<1x256xi32>
    %c0_i32_1 = arith.constant 0 : i32
    %11 = vector.broadcast %c0_i32_1 : i32 to vector<1x256xi32>
    %12 = arith.cmpi ne, %10, %11 : vector<1x256xi32>
    %c8_i32 = arith.constant 8 : i32
    %13 = vector.broadcast %c8_i32 : i32 to vector<1x256xi32>
    %14 = arith.andi %0, %13 : vector<1x256xi32>
    %c0_i32_2 = arith.constant 0 : i32
    %15 = vector.broadcast %c0_i32_2 : i32 to vector<1x256xi32>
    %16 = arith.cmpi ne, %14, %15 : vector<1x256xi32>
    %c16_i32 = arith.constant 16 : i32
    %17 = vector.broadcast %c16_i32 : i32 to vector<1x256xi32>
    %18 = arith.andi %0, %17 : vector<1x256xi32>
    %c0_i32_3 = arith.constant 0 : i32
    %19 = vector.broadcast %c0_i32_3 : i32 to vector<1x256xi32>
    %20 = arith.cmpi ne, %18, %19 : vector<1x256xi32>
    %c32_i32 = arith.constant 32 : i32
    %21 = vector.broadcast %c32_i32 : i32 to vector<1x256xi32>
    %22 = arith.andi %0, %21 : vector<1x256xi32>
    %c0_i32_4 = arith.constant 0 : i32
    %23 = vector.broadcast %c0_i32_4 : i32 to vector<1x256xi32>
    %24 = arith.cmpi ne, %22, %23 : vector<1x256xi32>
    %c64_i32 = arith.constant 64 : i32
    %25 = vector.broadcast %c64_i32 : i32 to vector<1x256xi32>
    %26 = arith.andi %0, %25 : vector<1x256xi32>
    %c0_i32_5 = arith.constant 0 : i32
    %27 = vector.broadcast %c0_i32_5 : i32 to vector<1x256xi32>
    %28 = arith.cmpi ne, %26, %27 : vector<1x256xi32>
    %c128_i32 = arith.constant 128 : i32
    %29 = vector.broadcast %c128_i32 : i32 to vector<1x256xi32>
    %30 = arith.andi %0, %29 : vector<1x256xi32>
    %c0_i32_6 = arith.constant 0 : i32
    %31 = vector.broadcast %c0_i32_6 : i32 to vector<1x256xi32>
    %32 = arith.cmpi ne, %30, %31 : vector<1x256xi32>
    %c0_i32_7 = arith.constant 0 : i32
    %c128_i32_8 = arith.constant 128 : i32
    %33 = arith.muli %c0_i32_7, %c128_i32_8 : i32
    %34 = tpu.assume_multiple %33, 128 : i32
    %c0 = arith.constant 0 : index
    %35 = arith.index_cast %34 : i32 to index
    %36 = vector.load %arg1[%c0, %35] : memref<8x128xf32, #tpu.memory_space<vmem>>, vector<8x128xf32>
    %37 = tpu.transpose %36, [1, 0] : vector<8x128xf32> -> vector<128x8xf32>
    %cst = arith.constant 1.000000e+00 : f32
    %38 = vector.broadcast %cst : f32 to vector<128x8xf32>
    %39 = arith.subf %38, %37 : vector<128x8xf32>
    %40 = vector.extract_strided_slice %37 {offsets = [0, 0], sizes = [128, 1], strides = [1, 1]} : vector<128x8xf32> to vector<128x1xf32>
    %41 = vector.extract_strided_slice %39 {offsets = [0, 0], sizes = [128, 1], strides = [1, 1]} : vector<128x8xf32> to vector<128x1xf32>
    %42 = vector.shape_cast %4 : vector<1x256xi1> to vector<1x256xi1>
    %43 = vector.broadcast %42 : vector<1x256xi1> to vector<128x256xi1>
    %44 = vector.shape_cast %40 : vector<128x1xf32> to vector<128x1xf32>
    %45 = vector.broadcast %44 : vector<128x1xf32> to vector<128x256xf32>
    %46 = vector.shape_cast %41 : vector<128x1xf32> to vector<128x1xf32>
    %47 = vector.broadcast %46 : vector<128x1xf32> to vector<128x256xf32>
    %48 = arith.select %43, %45, %47 : vector<128x256xi1>, vector<128x256xf32>
    %49 = vector.extract_strided_slice %37 {offsets = [0, 1], sizes = [128, 1], strides = [1, 1]} : vector<128x8xf32> to vector<128x1xf32>
    %50 = vector.extract_strided_slice %39 {offsets = [0, 1], sizes = [128, 1], strides = [1, 1]} : vector<128x8xf32> to vector<128x1xf32>
    %51 = vector.shape_cast %8 : vector<1x256xi1> to vector<1x256xi1>
    %52 = vector.broadcast %51 : vector<1x256xi1> to vector<128x256xi1>
    %53 = vector.shape_cast %49 : vector<128x1xf32> to vector<128x1xf32>
    %54 = vector.broadcast %53 : vector<128x1xf32> to vector<128x256xf32>
    %55 = vector.shape_cast %50 : vector<128x1xf32> to vector<128x1xf32>
    %56 = vector.broadcast %55 : vector<128x1xf32> to vector<128x256xf32>
    %57 = arith.select %52, %54, %56 : vector<128x256xi1>, vector<128x256xf32>
    %58 = arith.mulf %48, %57 : vector<128x256xf32>
    %59 = vector.extract_strided_slice %37 {offsets = [0, 2], sizes = [128, 1], strides = [1, 1]} : vector<128x8xf32> to vector<128x1xf32>
    %60 = vector.extract_strided_slice %39 {offsets = [0, 2], sizes = [128, 1], strides = [1, 1]} : vector<128x8xf32> to vector<128x1xf32>
    %61 = vector.shape_cast %12 : vector<1x256xi1> to vector<1x256xi1>
    %62 = vector.broadcast %61 : vector<1x256xi1> to vector<128x256xi1>
    %63 = vector.shape_cast %59 : vector<128x1xf32> to vector<128x1xf32>
    %64 = vector.broadcast %63 : vector<128x1xf32> to vector<128x256xf32>
    %65 = vector.shape_cast %60 : vector<128x1xf32> to vector<128x1xf32>
    %66 = vector.broadcast %65 : vector<128x1xf32> to vector<128x256xf32>
    %67 = arith.select %62, %64, %66 : vector<128x256xi1>, vector<128x256xf32>
    %68 = arith.mulf %58, %67 : vector<128x256xf32>
    %69 = vector.extract_strided_slice %37 {offsets = [0, 3], sizes = [128, 1], strides = [1, 1]} : vector<128x8xf32> to vector<128x1xf32>
    %70 = vector.extract_strided_slice %39 {offsets = [0, 3], sizes = [128, 1], strides = [1, 1]} : vector<128x8xf32> to vector<128x1xf32>
    %71 = vector.shape_cast %16 : vector<1x256xi1> to vector<1x256xi1>
    %72 = vector.broadcast %71 : vector<1x256xi1> to vector<128x256xi1>
    %73 = vector.shape_cast %69 : vector<128x1xf32> to vector<128x1xf32>
    %74 = vector.broadcast %73 : vector<128x1xf32> to vector<128x256xf32>
    %75 = vector.shape_cast %70 : vector<128x1xf32> to vector<128x1xf32>
    %76 = vector.broadcast %75 : vector<128x1xf32> to vector<128x256xf32>
    %77 = arith.select %72, %74, %76 : vector<128x256xi1>, vector<128x256xf32>
    %78 = arith.mulf %68, %77 : vector<128x256xf32>
    %79 = vector.extract_strided_slice %37 {offsets = [0, 4], sizes = [128, 1], strides = [1, 1]} : vector<128x8xf32> to vector<128x1xf32>
    %80 = vector.extract_strided_slice %39 {offsets = [0, 4], sizes = [128, 1], strides = [1, 1]} : vector<128x8xf32> to vector<128x1xf32>
    %81 = vector.shape_cast %20 : vector<1x256xi1> to vector<1x256xi1>
    %82 = vector.broadcast %81 : vector<1x256xi1> to vector<128x256xi1>
    %83 = vector.shape_cast %79 : vector<128x1xf32> to vector<128x1xf32>
    %84 = vector.broadcast %83 : vector<128x1xf32> to vector<128x256xf32>
    %85 = vector.shape_cast %80 : vector<128x1xf32> to vector<128x1xf32>
    %86 = vector.broadcast %85 : vector<128x1xf32> to vector<128x256xf32>
    %87 = arith.select %82, %84, %86 : vector<128x256xi1>, vector<128x256xf32>
    %88 = arith.mulf %78, %87 : vector<128x256xf32>
    %89 = vector.extract_strided_slice %37 {offsets = [0, 5], sizes = [128, 1], strides = [1, 1]} : vector<128x8xf32> to vector<128x1xf32>
    %90 = vector.extract_strided_slice %39 {offsets = [0, 5], sizes = [128, 1], strides = [1, 1]} : vector<128x8xf32> to vector<128x1xf32>
    %91 = vector.shape_cast %24 : vector<1x256xi1> to vector<1x256xi1>
    %92 = vector.broadcast %91 : vector<1x256xi1> to vector<128x256xi1>
    %93 = vector.shape_cast %89 : vector<128x1xf32> to vector<128x1xf32>
    %94 = vector.broadcast %93 : vector<128x1xf32> to vector<128x256xf32>
    %95 = vector.shape_cast %90 : vector<128x1xf32> to vector<128x1xf32>
    %96 = vector.broadcast %95 : vector<128x1xf32> to vector<128x256xf32>
    %97 = arith.select %92, %94, %96 : vector<128x256xi1>, vector<128x256xf32>
    %98 = arith.mulf %88, %97 : vector<128x256xf32>
    %99 = vector.extract_strided_slice %37 {offsets = [0, 6], sizes = [128, 1], strides = [1, 1]} : vector<128x8xf32> to vector<128x1xf32>
    %100 = vector.extract_strided_slice %39 {offsets = [0, 6], sizes = [128, 1], strides = [1, 1]} : vector<128x8xf32> to vector<128x1xf32>
    %101 = vector.shape_cast %28 : vector<1x256xi1> to vector<1x256xi1>
    %102 = vector.broadcast %101 : vector<1x256xi1> to vector<128x256xi1>
    %103 = vector.shape_cast %99 : vector<128x1xf32> to vector<128x1xf32>
    %104 = vector.broadcast %103 : vector<128x1xf32> to vector<128x256xf32>
    %105 = vector.shape_cast %100 : vector<128x1xf32> to vector<128x1xf32>
    %106 = vector.broadcast %105 : vector<128x1xf32> to vector<128x256xf32>
    %107 = arith.select %102, %104, %106 : vector<128x256xi1>, vector<128x256xf32>
    %108 = arith.mulf %98, %107 : vector<128x256xf32>
    %109 = vector.extract_strided_slice %37 {offsets = [0, 7], sizes = [128, 1], strides = [1, 1]} : vector<128x8xf32> to vector<128x1xf32>
    %110 = vector.extract_strided_slice %39 {offsets = [0, 7], sizes = [128, 1], strides = [1, 1]} : vector<128x8xf32> to vector<128x1xf32>
    %111 = vector.shape_cast %32 : vector<1x256xi1> to vector<1x256xi1>
    %112 = vector.broadcast %111 : vector<1x256xi1> to vector<128x256xi1>
    %113 = vector.shape_cast %109 : vector<128x1xf32> to vector<128x1xf32>
    %114 = vector.broadcast %113 : vector<128x1xf32> to vector<128x256xf32>
    %115 = vector.shape_cast %110 : vector<128x1xf32> to vector<128x1xf32>
    %116 = vector.broadcast %115 : vector<128x1xf32> to vector<128x256xf32>
    %117 = arith.select %112, %114, %116 : vector<128x256xi1>, vector<128x256xf32>
    %118 = arith.mulf %108, %117 : vector<128x256xf32>
    %119 = arith.index_cast %34 : i32 to index
    %c0_9 = arith.constant 0 : index
    %120 = vector.load %arg2[%119, %c0_9] : memref<128x256xf32, #tpu.memory_space<vmem>>, vector<128x256xf32>
    tpu.vector_store %arg2[%119, %c0_9], %118 {strides = array<i32>} : memref<128x256xf32, #tpu.memory_space<vmem>>, vector<128x256xf32>,
    %c1_i32_10 = arith.constant 1 : i32
    return
  }
  func.func @transform_0(%arg0: i32) -> (i32, i32) {
    %c0_i32 = arith.constant 0 : i32
    %c0_i32_0 = arith.constant 0 : i32
    return %c0_i32, %arg0 : i32, i32
  }
  func.func @transform_1(%arg0: i32) -> (i32, i32) {
    %c0_i32 = arith.constant 0 : i32
    %c0_i32_0 = arith.constant 0 : i32
    return %arg0, %c0_i32 : i32, i32
  }
}

</mosaic_0001>

<llo_original>
// kernel: occupancy_to_topology.1
$region0: #{occupancy_to_topology.1}
  #allocation0 [shape = 'u32[]', space=smem, size = 0x4, offset = 0x4, fixed_abs, tag = 'smem constant byte address 0x4 - core index']
  #allocation1 [shape = 'u32[144,128]{1,0:T(1,128)}', space=vmem, size = 0x12000, scoped, tag = 'internal scratch']
  %s0 = inlined_call_operand.vmem [shape: f32[8,512], index: 0, kind: input, shape index: {}]
  %s1 = inlined_call_operand.hbm [shape: f32[512,256], index: 1, kind: output, shape index: {}]
  %s2 = sld [smem:[#allocation0]]
  $region37: #{occupancy_to_topology.1} parent=0
    _
  %s4 = ssub.s32 1, %s2
  %s5 = scalar_select 0, %s4, %s2
  $region1: #{occupancy_to_topology.1} parent=0
    #allocation2 [shape = 'u8[262144]{0}', space=vmem, size = 0x40000, scoped, tag = 'output window, operand 0']
    #allocation3 [shape = 's32[2]{0}', space=sflag, size = 0x8, scoped, tag = 'scoped memory for occupancy_to_topology.1']
    %6 = vsyncpa [#allocation3], 0
    %s7 = scalar_lea.sflag [#allocation3], 1
    %8 = vsyncpa %s7, 0
    loop: start=0, step=1, limit=6
    $region2: #{occupancy_to_topology.1} parent=1 // loop_pre_header
      _
    $region3: #{occupancy_to_topology.1} parent=1 // loop_header
      %s10 = sphi 0, %s14
      %p11 = scmp.ge.s32.totalorder %s10, 6
      %s20 = sphi 0, %s22
      %s23 = sphi 0, %s20
      %s24 = sphi 0, %s23
      %s40 = sphi 0, %s24
      %s46 = sphi 0, %s48
      %s49 = sphi 0, %s46
      %s50 = sphi 0, %s49
      %s66 = sphi 0, %s50
    $region4: #{occupancy_to_topology.1} parent=1 // loop_header_branch
      %13 = sbr.rel (%p11) target = $region8
    $region5: #{occupancy_to_topology.1} parent=1 // loop_body
      %s15 = ssub.s32 %s10, 1
      %s16 = ssub.s32 %s10, 2
      %s17 = sadd.s32 %s10, 1
      %s18 = ssub.s32 %s10, %s17
      %p19 = scmp.eq.s32.totalorder %s18, 0
      %s21 = sadd.s32 %s20, 1
      %s22 = scalar_select %p19, %s20, %s21
      %p25 = pneg %p19
      %p26 = scmp.eq.s32.totalorder %s10, 3
      %p27 = por %p25, %p26
      %p28 = scmp.ne.s32.totalorder %s20, %s23
      %p29 = scmp.eq.s32.totalorder %s10, 0
      %p30 = por %p28, %p29
      %p31 = scmp.ne.s32.totalorder %s20, %s23
      %p32 = scmp.eq.s32.totalorder %s15, 3
      %p33 = por %p31, %p32
      %p34 = scmp.ne.s32.totalorder %s23, %s24
      %p35 = scmp.eq.s32.totalorder %s15, 0
      %p36 = por %p34, %p35
      %p37 = scmp.ne.s32.totalorder %s23, %s24
      %p38 = scmp.eq.s32.totalorder %s16, 3
      %p39 = por %p37, %p38
      %p41 = scmp.ne.s32.totalorder %s24, %s40
      %p42 = scmp.eq.s32.totalorder %s16, 0
      %p43 = por %p41, %p42
      %s44 = ssub.s32 %s10, %s17
      %p45 = scmp.eq.s32.totalorder %s44, 0
      %s47 = sadd.s32 %s46, 1
      %s48 = scalar_select %p45, %s46, %s47
      %p51 = pneg %p45
      %p52 = scmp.eq.s32.totalorder %s10, 3
      %p53 = por %p51, %p52
      %p54 = scmp.ne.s32.totalorder %s46, %s49
      %p55 = scmp.eq.s32.totalorder %s10, 0
      %p56 = por %p54, %p55
      %p57 = scmp.ne.s32.totalorder %s46, %s49
      %p58 = scmp.eq.s32.totalorder %s15, 3
      %p59 = por %p57, %p58
      %p60 = scmp.ne.s32.totalorder %s49, %s50
      %p61 = scmp.eq.s32.totalorder %s15, 0
      %p62 = por %p60, %p61
      %p63 = scmp.ne.s32.totalorder %s49, %s50
      %p64 = scmp.eq.s32.totalorder %s16, 3
      %p65 = por %p63, %p64
      %p67 = scmp.ne.s32.totalorder %s50, %s66
      %p68 = scmp.eq.s32.totalorder %s16, 0
      %p69 = por %p67, %p68
      %p70 = scmp.le.s32.totalorder 1, %s10
      %p71 = scmp.lt.s32.totalorder %s10, 5
      %p72 = pnand %p70, %p71
      %p73 = pneg %p72
      // Predicated region
      $region9: #{occupancy_to_topology.1} parent=5 // pred_check
        _
      $region10: #{occupancy_to_topology.1} parent=5 // pred_check_branch
        %75 = sbr.rel (%p72) target = $region12
      $region11: #{occupancy_to_topology.1} parent=5 // pred_region
        %s76 = ssub.s32 %s10, 1
      $region12: #{occupancy_to_topology.1} parent=5 // pred_fallthru
        _
      %p77 = scmp.lt.s32.totalorder %s10, 4
      // Predicated region
      $region13: #{occupancy_to_topology.1} parent=5 // pred_check
        %p78 = pneg %p77
      $region14: #{occupancy_to_topology.1} parent=5 // pred_check_branch
        %80 = sbr.rel (%p78) target = $region16
      $region15: #{occupancy_to_topology.1} parent=5 // pred_region
        // Predicated region
        $region17: #{occupancy_to_topology.1} parent=15 // pred_check
          %p81 = pneg %p30
        $region18: #{occupancy_to_topology.1} parent=15 // pred_check_branch
          %83 = sbr.rel (%p81) target = $region20
        $region19: #{occupancy_to_topology.1} parent=15 // pred_region
          %p84 = scmp.lt.s32.totalorder %s10, 3
          %s85 = scalar_select %p84, %s10, 3
          %s86 = smul.addr %s85, 8
          %s87 = scalar_lea.vmem %s0, %s86
        $region20: #{occupancy_to_topology.1} parent=15 // pred_fallthru
          _
      $region16: #{occupancy_to_topology.1} parent=5 // pred_fallthru
        _
      %p88 = scmp.le.s32.totalorder 1, %s10
      %p89 = scmp.lt.s32.totalorder %s10, 5
      %p90 = pnand %p88, %p89
      %p91 = pneg %p90
      // Predicated region
      $region21: #{occupancy_to_topology.1} parent=5 // pred_check
        _
      $region22: #{occupancy_to_topology.1} parent=5 // pred_check_branch
        %93 = sbr.rel (%p90) target = $region24
      $region23: #{occupancy_to_topology.1} parent=5 // pred_region
        %s94 = ssub.s32 %s10, 1
        %p95 = scmp.lt.s32.totalorder %s15, 3
        %s96 = scalar_select %p95, %s15, 3
        %s97 = smul.addr %s96, 8
        %s98 = scalar_lea.vmem %s0, %s97
        %p99 = pneg %p36
        %p100 = pneg %p33
        %p101 = pneg %p62
        %p102 = pneg %p59
        %s103 = sand.u32 %s49, 1
        %s104 = scalar_lea.sflag [#allocation3], %s103
        %s105 = sand.u32 %s49, 1
        %s106 = smul.addr %s105, 256
        %s107 = scalar_lea.vmem [#allocation2], %s106
        %p108 = scmp.lt.s32.totalorder %s15, 3
        %s109 = scalar_select %p108, %s15, 3
        %s110 = smul.addr %s109, 8
        %s111 = scalar_lea.vmem %s0, %s110
        %s112 = smul.u32 16, %s15
        %v113 = vlaneseq
        %v114 = vand.u32 %v113, 127
        %v115 = vadd.s32 %v114, 128
        %v116 = vand.u32 %v114, 1
        %v117 = vand.u32 %v115, 1
        %vm118 = vcmp.ne.s32.totalorder %v116, 0
        %vm119 = vcmp.ne.s32.totalorder %v117, 0
        %v120 = vand.u32 %v114, 2
        %v121 = vand.u32 %v115, 2
        %vm122 = vcmp.ne.s32.totalorder %v120, 0
        %vm123 = vcmp.ne.s32.totalorder %v121, 0
        %v124 = vand.u32 %v114, 4
        %v125 = vand.u32 %v115, 4
        %vm126 = vcmp.ne.s32.totalorder %v124, 0
        %vm127 = vcmp.ne.s32.totalorder %v125, 0
        %v128 = vand.u32 %v114, 8
        %v129 = vand.u32 %v115, 8
        %vm130 = vcmp.ne.s32.totalorder %v128, 0
        %vm131 = vcmp.ne.s32.totalorder %v129, 0
        %v132 = vand.u32 %v114, 16
        %v133 = vand.u32 %v115, 16
        %vm134 = vcmp.ne.s32.totalorder %v132, 0
        %vm135 = vcmp.ne.s32.totalorder %v133, 0
        %v136 = vand.u32 %v114, 32
        %v137 = vand.u32 %v115, 32
        %vm138 = vcmp.ne.s32.totalorder %v136, 0
        %vm139 = vcmp.ne.s32.totalorder %v137, 0
        %v140 = vand.u32 %v114, 64
        %v141 = vand.u32 %v115, 64
        %vm142 = vcmp.ne.s32.totalorder %v140, 0
        %vm143 = vcmp.ne.s32.totalorder %v141, 0
        %v144 = vand.u32 %v114, 128
        %v145 = vand.u32 %v115, 128
        %vm146 = vcmp.ne.s32.totalorder %v144, 0
        %vm147 = vcmp.ne.s32.totalorder %v145, 0
        %v148 = vld [vmem:[%s111] sm:$0xff]
        %149 = vxpose.xlu0.b32.start [1/16] %v148, 128
        %150 = vxpose.xlu0.b32.cont [2/16] 0.0, 128
        %151 = vxpose.xlu0.b32.cont [3/16] 0.0, 128
        %152 = vxpose.xlu0.b32.cont [4/16] 0.0, 128
        %153 = vxpose.xlu0.b32.cont [5/16] 0.0, 128
        %154 = vxpose.xlu0.b32.cont [6/16] 0.0, 128
        %155 = vxpose.xlu0.b32.cont [7/16] 0.0, 128
        %156 = vxpose.xlu0.b32.cont [8/16] 0.0, 128
        %157 = vxpose.xlu0.b32.cont [9/16] 0.0, 128
        %158 = vxpose.xlu0.b32.cont [10/16] 0.0, 128
        %159 = vxpose.xlu0.b32.cont [11/16] 0.0, 128
        %160 = vxpose.xlu0.b32.cont [12/16] 0.0, 128
        %161 = vxpose.xlu0.b32.cont [13/16] 0.0, 128
        %162 = vxpose.xlu0.b32.cont [14/16] 0.0, 128
        %163 = vxpose.xlu0.b32.cont [15/16] 0.0, 128
        %164 = vxpose.xlu0.b32.end [16/16] 0.0, 128
        %v165 = vpop.trf.xlu0
        %v166 = vpop.trf.xlu0
        %v167 = vpop.trf.xlu0
        %v168 = vpop.trf.xlu0
        %v169 = vpop.trf.xlu0
        %v170 = vpop.trf.xlu0
        %v171 = vpop.trf.xlu0
        %v172 = vpop.trf.xlu0
        %v173 = vpop.trf.xlu0
        %v174 = vpop.trf.xlu0
        %v175 = vpop.trf.xlu0
        %v176 = vpop.trf.xlu0
        %v177 = vpop.trf.xlu0
        %v178 = vpop.trf.xlu0
        %v179 = vpop.trf.xlu0
        %v180 = vpop.trf.xlu0
        %v181 = vsub.f32 1.0, %v165
        %v182 = vsub.f32 1.0, %v166
        %v183 = vsub.f32 1.0, %v167
        %v184 = vsub.f32 1.0, %v168
        %v185 = vsub.f32 1.0, %v169
        %v186 = vsub.f32 1.0, %v170
        %v187 = vsub.f32 1.0, %v171
        %v188 = vsub.f32 1.0, %v172
        %v189 = vsub.f32 1.0, %v173
        %v190 = vsub.f32 1.0, %v174
        %v191 = vsub.f32 1.0, %v175
        %v192 = vsub.f32 1.0, %v176
        %v193 = vsub.f32 1.0, %v177
        %v194 = vsub.f32 1.0, %v178
        %v195 = vsub.f32 1.0, %v179
        %v196 = vsub.f32 1.0, %v180
        %v197 = vsel %vm118, 1, 0
        %v198 = vsel %vm119, 1, 0
        %vm199 = vcmp.eq.s32.totalorder %v197, 1
        %vm200 = vcmp.eq.s32.totalorder %v198, 1
        %202 = vset.pattern.permute.xlu0 0
        %203 = vperm.xlu0 %202, %v165
        %v204 = vpop.permute.xlu0 %203
        %207 = vset.pattern.permute.xlu0 0
        %208 = vperm.xlu0 %207, %v166
        %v209 = vpop.permute.xlu0 %208
        %212 = vset.pattern.permute.xlu0 0
        %213 = vperm.xlu0 %212, %v167
        %v214 = vpop.permute.xlu0 %213
        %217 = vset.pattern.permute.xlu0 0
        %218 = vperm.xlu0 %217, %v168
        %v219 = vpop.permute.xlu0 %218
        %222 = vset.pattern.permute.xlu0 0
        %223 = vperm.xlu0 %222, %v169
        %v224 = vpop.permute.xlu0 %223
        %227 = vset.pattern.permute.xlu0 0
        %228 = vperm.xlu0 %227, %v170
        %v229 = vpop.permute.xlu0 %228
        %232 = vset.pattern.permute.xlu0 0
        %233 = vperm.xlu0 %232, %v171
        %v234 = vpop.permute.xlu0 %233
        %237 = vset.pattern.permute.xlu0 0
        %238 = vperm.xlu0 %237, %v172
        %v239 = vpop.permute.xlu0 %238
        %242 = vset.pattern.permute.xlu0 0
        %243 = vperm.xlu0 %242, %v173
        %v244 = vpop.permute.xlu0 %243
        %247 = vset.pattern.permute.xlu0 0
        %248 = vperm.xlu0 %247, %v174
        %v249 = vpop.permute.xlu0 %248
        %252 = vset.pattern.permute.xlu0 0
        %253 = vperm.xlu0 %252, %v175
        %v254 = vpop.permute.xlu0 %253
        %257 = vset.pattern.permute.xlu0 0
        %258 = vperm.xlu0 %257, %v176
        %v259 = vpop.permute.xlu0 %258
        %262 = vset.pattern.permute.xlu0 0
        %263 = vperm.xlu0 %262, %v177
        %v264 = vpop.permute.xlu0 %263
        %267 = vset.pattern.permute.xlu0 0
        %268 = vperm.xlu0 %267, %v178
        %v269 = vpop.permute.xlu0 %268
        %272 = vset.pattern.permute.xlu0 0
        %273 = vperm.xlu0 %272, %v179
        %v274 = vpop.permute.xlu0 %273
        %277 = vset.pattern.permute.xlu0 0
        %278 = vperm.xlu0 %277, %v180
        %v279 = vpop.permute.xlu0 %278
        %282 = vset.pattern.permute.xlu0 0
        %283 = vperm.xlu0 %282, %v181
        %v284 = vpop.permute.xlu0 %283
        %287 = vset.pattern.permute.xlu0 0
        %288 = vperm.xlu0 %287, %v182
        %v289 = vpop.permute.xlu0 %288
        %292 = vset.pattern.permute.xlu0 0
        %293 = vperm.xlu0 %292, %v183
        %v294 = vpop.permute.xlu0 %293
        %297 = vset.pattern.permute.xlu0 0
        %298 = vperm.xlu0 %297, %v184
        %v299 = vpop.permute.xlu0 %298
        %302 = vset.pattern.permute.xlu0 0
        %303 = vperm.xlu0 %302, %v185
        %v304 = vpop.permute.xlu0 %303
        %307 = vset.pattern.permute.xlu0 0
        %308 = vperm.xlu0 %307, %v186
        %v309 = vpop.permute.xlu0 %308
        %312 = vset.pattern.permute.xlu0 0
        %313 = vperm.xlu0 %312, %v187
        %v314 = vpop.permute.xlu0 %313
        %317 = vset.pattern.permute.xlu0 0
        %318 = vperm.xlu0 %317, %v188
        %v319 = vpop.permute.xlu0 %318
        %322 = vset.pattern.permute.xlu0 0
        %323 = vperm.xlu0 %322, %v189
        %v324 = vpop.permute.xlu0 %323
        %327 = vset.pattern.permute.xlu0 0
        %328 = vperm.xlu0 %327, %v190
        %v329 = vpop.permute.xlu0 %328
        %332 = vset.pattern.permute.xlu0 0
        %333 = vperm.xlu0 %332, %v191
        %v334 = vpop.permute.xlu0 %333
        %337 = vset.pattern.permute.xlu0 0
        %338 = vperm.xlu0 %337, %v192
        %v339 = vpop.permute.xlu0 %338
        %342 = vset.pattern.permute.xlu0 0
        %343 = vperm.xlu0 %342, %v193
        %v344 = vpop.permute.xlu0 %343
        %347 = vset.pattern.permute.xlu0 0
        %348 = vperm.xlu0 %347, %v194
        %v349 = vpop.permute.xlu0 %348
        %352 = vset.pattern.permute.xlu0 0
        %353 = vperm.xlu0 %352, %v195
        %v354 = vpop.permute.xlu0 %353
        %357 = vset.pattern.permute.xlu0 0
        %358 = vperm.xlu0 %357, %v196
        %v359 = vpop.permute.xlu0 %358
        %v361 = vsel %vm199, %v204, %v284
        %v362 = vsel %vm200, %v204, %v284
        %v363 = vsel %vm199, %v209, %v289
        %v364 = vsel %vm200, %v209, %v289
        %v365 = vsel %vm199, %v214, %v294
        %v366 = vsel %vm200, %v214, %v294
        %v367 = vsel %vm199, %v219, %v299
        %v368 = vsel %vm200, %v219, %v299
        %v369 = vsel %vm199, %v224, %v304
        %v370 = vsel %vm200, %v224, %v304
        %v371 = vsel %vm199, %v229, %v309
        %v372 = vsel %vm200, %v229, %v309
        %v373 = vsel %vm199, %v234, %v314
        %v374 = vsel %vm200, %v234, %v314
        %v375 = vsel %vm199, %v239, %v319
        %v376 = vsel %vm200, %v239, %v319
        %v377 = vsel %vm199, %v244, %v324
        %v378 = vsel %vm200, %v244, %v324
        %v379 = vsel %vm199, %v249, %v329
        %v380 = vsel %vm200, %v249, %v329
        %v381 = vsel %vm199, %v254, %v334
        %v382 = vsel %vm200, %v254, %v334
        %v383 = vsel %vm199, %v259, %v339
        %v384 = vsel %vm200, %v259, %v339
        %v385 = vsel %vm199, %v264, %v344
        %v386 = vsel %vm200, %v264, %v344
        %v387 = vsel %vm199, %v269, %v349
        %v388 = vsel %vm200, %v269, %v349
        %v389 = vsel %vm199, %v274, %v354
        %v390 = vsel %vm200, %v274, %v354
        %v391 = vsel %vm199, %v279, %v359
        %v392 = vsel %vm200, %v279, %v359
        %v393 = vsel %vm122, 1, 0
        %v394 = vsel %vm123, 1, 0
        %vm395 = vcmp.eq.s32.totalorder %v393, 1
        %vm396 = vcmp.eq.s32.totalorder %v394, 1
        %397 = vset.pattern.permute.xlu0 1
        %398 = vperm.xlu0 %397, %v165
        %v399 = vpop.permute.xlu0 %398
        %401 = vset.pattern.permute.xlu0 1
        %402 = vperm.xlu0 %401, %v166
        %v403 = vpop.permute.xlu0 %402
        %405 = vset.pattern.permute.xlu0 1
        %406 = vperm.xlu0 %405, %v167
        %v407 = vpop.permute.xlu0 %406
        %409 = vset.pattern.permute.xlu0 1
        %410 = vperm.xlu0 %409, %v168
        %v411 = vpop.permute.xlu0 %410
        %413 = vset.pattern.permute.xlu0 1
        %414 = vperm.xlu0 %413, %v169
        %v415 = vpop.permute.xlu0 %414
        %417 = vset.pattern.permute.xlu0 1
        %418 = vperm.xlu0 %417, %v170
        %v419 = vpop.permute.xlu0 %418
        %421 = vset.pattern.permute.xlu0 1
        %422 = vperm.xlu0 %421, %v171
        %v423 = vpop.permute.xlu0 %422
        %425 = vset.pattern.permute.xlu0 1
        %426 = vperm.xlu0 %425, %v172
        %v427 = vpop.permute.xlu0 %426
        %429 = vset.pattern.permute.xlu0 1
        %430 = vperm.xlu0 %429, %v173
        %v431 = vpop.permute.xlu0 %430
        %433 = vset.pattern.permute.xlu0 1
        %434 = vperm.xlu0 %433, %v174
        %v435 = vpop.permute.xlu0 %434
        %437 = vset.pattern.permute.xlu0 1
        %438 = vperm.xlu0 %437, %v175
        %v439 = vpop.permute.xlu0 %438
        %441 = vset.pattern.permute.xlu0 1
        %442 = vperm.xlu0 %441, %v176
        %v443 = vpop.permute.xlu0 %442
        %445 = vset.pattern.permute.xlu0 1
        %446 = vperm.xlu0 %445, %v177
        %v447 = vpop.permute.xlu0 %446
        %449 = vset.pattern.permute.xlu0 1
        %450 = vperm.xlu0 %449, %v178
        %v451 = vpop.permute.xlu0 %450
        %453 = vset.pattern.permute.xlu0 1
        %454 = vperm.xlu0 %453, %v179
        %v455 = vpop.permute.xlu0 %454
        %457 = vset.pattern.permute.xlu0 1
        %458 = vperm.xlu0 %457, %v180
        %v459 = vpop.permute.xlu0 %458
        %461 = vset.pattern.permute.xlu0 1
        %462 = vperm.xlu0 %461, %v181
        %v463 = vpop.permute.xlu0 %462
        %465 = vset.pattern.permute.xlu0 1
        %466 = vperm.xlu0 %465, %v182
        %v467 = vpop.permute.xlu0 %466
        %469 = vset.pattern.permute.xlu0 1
        %470 = vperm.xlu0 %469, %v183
        %v471 = vpop.permute.xlu0 %470
        %473 = vset.pattern.permute.xlu0 1
        %474 = vperm.xlu0 %473, %v184
        %v475 = vpop.permute.xlu0 %474
        %477 = vset.pattern.permute.xlu0 1
        %478 = vperm.xlu0 %477, %v185
        %v479 = vpop.permute.xlu0 %478
        %481 = vset.pattern.permute.xlu0 1
        %482 = vperm.xlu0 %481, %v186
        %v483 = vpop.permute.xlu0 %482
        %485 = vset.pattern.permute.xlu0 1
        %486 = vperm.xlu0 %485, %v187
        %v487 = vpop.permute.xlu0 %486
        %489 = vset.pattern.permute.xlu0 1
        %490 = vperm.xlu0 %489, %v188
        %v491 = vpop.permute.xlu0 %490
        %493 = vset.pattern.permute.xlu0 1
        %494 = vperm.xlu0 %493, %v189
        %v495 = vpop.permute.xlu0 %494
        %497 = vset.pattern.permute.xlu0 1
        %498 = vperm.xlu0 %497, %v190
        %v499 = vpop.permute.xlu0 %498
        %501 = vset.pattern.permute.xlu0 1
        %502 = vperm.xlu0 %501, %v191
        %v503 = vpop.permute.xlu0 %502
        %505 = vset.pattern.permute.xlu0 1
        %506 = vperm.xlu0 %505, %v192
        %v507 = vpop.permute.xlu0 %506
        %509 = vset.pattern.permute.xlu0 1
        %510 = vperm.xlu0 %509, %v193
        %v511 = vpop.permute.xlu0 %510
        %513 = vset.pattern.permute.xlu0 1
        %514 = vperm.xlu0 %513, %v194
        %v515 = vpop.permute.xlu0 %514
        %517 = vset.pattern.permute.xlu0 1
        %518 = vperm.xlu0 %517, %v195
        %v519 = vpop.permute.xlu0 %518
        %521 = vset.pattern.permute.xlu0 1
        %522 = vperm.xlu0 %521, %v196
        %v523 = vpop.permute.xlu0 %522
        %v525 = vsel %vm395, %v399, %v463
        %v526 = vsel %vm396, %v399, %v463
        %v527 = vsel %vm395, %v403, %v467
        %v528 = vsel %vm396, %v403, %v467
        %v529 = vsel %vm395, %v407, %v471
        %v530 = vsel %vm396, %v407, %v471
        %v531 = vsel %vm395, %v411, %v475
        %v532 = vsel %vm396, %v411, %v475
        %v533 = vsel %vm395, %v415, %v479
        %v534 = vsel %vm396, %v415, %v479
        %v535 = vsel %vm395, %v419, %v483
        %v536 = vsel %vm396, %v419, %v483
        %v537 = vsel %vm395, %v423, %v487
        %v538 = vsel %vm396, %v423, %v487
        %v539 = vsel %vm395, %v427, %v491
        %v540 = vsel %vm396, %v427, %v491
        %v541 = vsel %vm395, %v431, %v495
        %v542 = vsel %vm396, %v431, %v495
        %v543 = vsel %vm395, %v435, %v499
        %v544 = vsel %vm396, %v435, %v499
        %v545 = vsel %vm395, %v439, %v503
        %v546 = vsel %vm396, %v439, %v503
        %v547 = vsel %vm395, %v443, %v507
        %v548 = vsel %vm396, %v443, %v507
        %v549 = vsel %vm395, %v447, %v511
        %v550 = vsel %vm396, %v447, %v511
        %v551 = vsel %vm395, %v451, %v515
        %v552 = vsel %vm396, %v451, %v515
        %v553 = vsel %vm395, %v455, %v519
        %v554 = vsel %vm396, %v455, %v519
        %v555 = vsel %vm395, %v459, %v523
        %v556 = vsel %vm396, %v459, %v523
        %v557 = vmul.f32 %v361, %v525
        %v558 = vmul.f32 %v362, %v526
        %v559 = vmul.f32 %v363, %v527
        %v560 = vmul.f32 %v364, %v528
        %v561 = vmul.f32 %v365, %v529
        %v562 = vmul.f32 %v366, %v530
        %v563 = vmul.f32 %v367, %v531
        %v564 = vmul.f32 %v368, %v532
        %v565 = vmul.f32 %v369, %v533
        %v566 = vmul.f32 %v370, %v534
        %v567 = vmul.f32 %v371, %v535
        %v568 = vmul.f32 %v372, %v536
        %v569 = vmul.f32 %v373, %v537
        %v570 = vmul.f32 %v374, %v538
        %v571 = vmul.f32 %v375, %v539
        %v572 = vmul.f32 %v376, %v540
        %v573 = vmul.f32 %v377, %v541
        %v574 = vmul.f32 %v378, %v542
        %v575 = vmul.f32 %v379, %v543
        %v576 = vmul.f32 %v380, %v544
        %v577 = vmul.f32 %v381, %v545
        %v578 = vmul.f32 %v382, %v546
        %v579 = vmul.f32 %v383, %v547
        %v580 = vmul.f32 %v384, %v548
        %v581 = vmul.f32 %v385, %v549
        %v582 = vmul.f32 %v386, %v550
        %v583 = vmul.f32 %v387, %v551
        %v584 = vmul.f32 %v388, %v552
        %v585 = vmul.f32 %v389, %v553
        %v586 = vmul.f32 %v390, %v554
        %v587 = vmul.f32 %v391, %v555
        %v588 = vmul.f32 %v392, %v556
        %v589 = vsel %vm126, 1, 0
        %v590 = vsel %vm127, 1, 0
        %vm591 = vcmp.eq.s32.totalorder %v589, 1
        %vm592 = vcmp.eq.s32.totalorder %v590, 1
        %593 = vset.pattern.permute.xlu0 2
        %594 = vperm.xlu0 %593, %v165
        %v595 = vpop.permute.xlu0 %594
        %597 = vset.pattern.permute.xlu0 2
        %598 = vperm.xlu0 %597, %v166
        %v599 = vpop.permute.xlu0 %598
        %601 = vset.pattern.permute.xlu0 2
        %602 = vperm.xlu0 %601, %v167
        %v603 = vpop.permute.xlu0 %602
        %605 = vset.pattern.permute.xlu0 2
        %606 = vperm.xlu0 %605, %v168
        %v607 = vpop.permute.xlu0 %606
        %609 = vset.pattern.permute.xlu0 2
        %610 = vperm.xlu0 %609, %v169
        %v611 = vpop.permute.xlu0 %610
        %613 = vset.pattern.permute.xlu0 2
        %614 = vperm.xlu0 %613, %v170
        %v615 = vpop.permute.xlu0 %614
        %617 = vset.pattern.permute.xlu0 2
        %618 = vperm.xlu0 %617, %v171
        %v619 = vpop.permute.xlu0 %618
        %621 = vset.pattern.permute.xlu0 2
        %622 = vperm.xlu0 %621, %v172
        %v623 = vpop.permute.xlu0 %622
        %625 = vset.pattern.permute.xlu0 2
        %626 = vperm.xlu0 %625, %v173
        %v627 = vpop.permute.xlu0 %626
        %629 = vset.pattern.permute.xlu0 2
        %630 = vperm.xlu0 %629, %v174
        %v631 = vpop.permute.xlu0 %630
        %633 = vset.pattern.permute.xlu0 2
        %634 = vperm.xlu0 %633, %v175
        %v635 = vpop.permute.xlu0 %634
        %637 = vset.pattern.permute.xlu0 2
        %638 = vperm.xlu0 %637, %v176
        %v639 = vpop.permute.xlu0 %638
        %641 = vset.pattern.permute.xlu0 2
        %642 = vperm.xlu0 %641, %v177
        %v643 = vpop.permute.xlu0 %642
        %645 = vset.pattern.permute.xlu0 2
        %646 = vperm.xlu0 %645, %v178
        %v647 = vpop.permute.xlu0 %646
        %649 = vset.pattern.permute.xlu0 2
        %650 = vperm.xlu0 %649, %v179
        %v651 = vpop.permute.xlu0 %650
        %653 = vset.pattern.permute.xlu0 2
        %654 = vperm.xlu0 %653, %v180
        %v655 = vpop.permute.xlu0 %654
        %657 = vset.pattern.permute.xlu0 2
        %658 = vperm.xlu0 %657, %v181
        %v659 = vpop.permute.xlu0 %658
        %661 = vset.pattern.permute.xlu0 2
        %662 = vperm.xlu0 %661, %v182
        %v663 = vpop.permute.xlu0 %662
        %665 = vset.pattern.permute.xlu0 2
        %666 = vperm.xlu0 %665, %v183
        %v667 = vpop.permute.xlu0 %666
        %669 = vset.pattern.permute.xlu0 2
        %670 = vperm.xlu0 %669, %v184
        %v671 = vpop.permute.xlu0 %670
        %673 = vset.pattern.permute.xlu0 2
        %674 = vperm.xlu0 %673, %v185
        %v675 = vpop.permute.xlu0 %674
        %677 = vset.pattern.permute.xlu0 2
        %678 = vperm.xlu0 %677, %v186
        %v679 = vpop.permute.xlu0 %678
        %681 = vset.pattern.permute.xlu0 2
        %682 = vperm.xlu0 %681, %v187
        %v683 = vpop.permute.xlu0 %682
        %685 = vset.pattern.permute.xlu0 2
        %686 = vperm.xlu0 %685, %v188
        %v687 = vpop.permute.xlu0 %686
        %689 = vset.pattern.permute.xlu0 2
        %690 = vperm.xlu0 %689, %v189
        %v691 = vpop.permute.xlu0 %690
        %693 = vset.pattern.permute.xlu0 2
        %694 = vperm.xlu0 %693, %v190
        %v695 = vpop.permute.xlu0 %694
        %697 = vset.pattern.permute.xlu0 2
        %698 = vperm.xlu0 %697, %v191
        %v699 = vpop.permute.xlu0 %698
        %701 = vset.pattern.permute.xlu0 2
        %702 = vperm.xlu0 %701, %v192
        %v703 = vpop.permute.xlu0 %702
        %705 = vset.pattern.permute.xlu0 2
        %706 = vperm.xlu0 %705, %v193
        %v707 = vpop.permute.xlu0 %706
        %709 = vset.pattern.permute.xlu0 2
        %710 = vperm.xlu0 %709, %v194
        %v711 = vpop.permute.xlu0 %710
        %713 = vset.pattern.permute.xlu0 2
        %714 = vperm.xlu0 %713, %v195
        %v715 = vpop.permute.xlu0 %714
        %717 = vset.pattern.permute.xlu0 2
        %718 = vperm.xlu0 %717, %v196
        %v719 = vpop.permute.xlu0 %718
        %v721 = vsel %vm591, %v595, %v659
        %v722 = vsel %vm592, %v595, %v659
        %v723 = vsel %vm591, %v599, %v663
        %v724 = vsel %vm592, %v599, %v663
        %v725 = vsel %vm591, %v603, %v667
        %v726 = vsel %vm592, %v603, %v667
        %v727 = vsel %vm591, %v607, %v671
        %v728 = vsel %vm592, %v607, %v671
        %v729 = vsel %vm591, %v611, %v675
        %v730 = vsel %vm592, %v611, %v675
        %v731 = vsel %vm591, %v615, %v679
        %v732 = vsel %vm592, %v615, %v679
        %v733 = vsel %vm591, %v619, %v683
        %v734 = vsel %vm592, %v619, %v683
        %v735 = vsel %vm591, %v623, %v687
        %v736 = vsel %vm592, %v623, %v687
        %v737 = vsel %vm591, %v627, %v691
        %v738 = vsel %vm592, %v627, %v691
        %v739 = vsel %vm591, %v631, %v695
        %v740 = vsel %vm592, %v631, %v695
        %v741 = vsel %vm591, %v635, %v699
        %v742 = vsel %vm592, %v635, %v699
        %v743 = vsel %vm591, %v639, %v703
        %v744 = vsel %vm592, %v639, %v703
        %v745 = vsel %vm591, %v643, %v707
        %v746 = vsel %vm592, %v643, %v707
        %v747 = vsel %vm591, %v647, %v711
        %v748 = vsel %vm592, %v647, %v711
        %v749 = vsel %vm591, %v651, %v715
        %v750 = vsel %vm592, %v651, %v715
        %v751 = vsel %vm591, %v655, %v719
        %v752 = vsel %vm592, %v655, %v719
        %v753 = vmul.f32 %v557, %v721
        %v754 = vmul.f32 %v558, %v722
        %v755 = vmul.f32 %v559, %v723
        %v756 = vmul.f32 %v560, %v724
        %v757 = vmul.f32 %v561, %v725
        %v758 = vmul.f32 %v562, %v726
        %v759 = vmul.f32 %v563, %v727
        %v760 = vmul.f32 %v564, %v728
        %v761 = vmul.f32 %v565, %v729
        %v762 = vmul.f32 %v566, %v730
        %v763 = vmul.f32 %v567, %v731
        %v764 = vmul.f32 %v568, %v732
        %v765 = vmul.f32 %v569, %v733
        %v766 = vmul.f32 %v570, %v734
        %v767 = vmul.f32 %v571, %v735
        %v768 = vmul.f32 %v572, %v736
        %v769 = vmul.f32 %v573, %v737
        %v770 = vmul.f32 %v574, %v738
        %v771 = vmul.f32 %v575, %v739
        %v772 = vmul.f32 %v576, %v740
        %v773 = vmul.f32 %v577, %v741
        %v774 = vmul.f32 %v578, %v742
        %v775 = vmul.f32 %v579, %v743
        %v776 = vmul.f32 %v580, %v744
        %v777 = vmul.f32 %v581, %v745
        %v778 = vmul.f32 %v582, %v746
        %v779 = vmul.f32 %v583, %v747
        %v780 = vmul.f32 %v584, %v748
        %v781 = vmul.f32 %v585, %v749
        %v782 = vmul.f32 %v586, %v750
        %v783 = vmul.f32 %v587, %v751
        %v784 = vmul.f32 %v588, %v752
        %v785 = vsel %vm130, 1, 0
        %v786 = vsel %vm131, 1, 0
        %vm787 = vcmp.eq.s32.totalorder %v785, 1
        %vm788 = vcmp.eq.s32.totalorder %v786, 1
        %789 = vset.pattern.permute.xlu0 3
        %790 = vperm.xlu0 %789, %v165
        %v791 = vpop.permute.xlu0 %790
        %793 = vset.pattern.permute.xlu0 3
        %794 = vperm.xlu0 %793, %v166
        %v795 = vpop.permute.xlu0 %794
        %797 = vset.pattern.permute.xlu0 3
        %798 = vperm.xlu0 %797, %v167
        %v799 = vpop.permute.xlu0 %798
        %801 = vset.pattern.permute.xlu0 3
        %802 = vperm.xlu0 %801, %v168
        %v803 = vpop.permute.xlu0 %802
        %805 = vset.pattern.permute.xlu0 3
        %806 = vperm.xlu0 %805, %v169
        %v807 = vpop.permute.xlu0 %806
        %809 = vset.pattern.permute.xlu0 3
        %810 = vperm.xlu0 %809, %v170
        %v811 = vpop.permute.xlu0 %810
        %813 = vset.pattern.permute.xlu0 3
        %814 = vperm.xlu0 %813, %v171
        %v815 = vpop.permute.xlu0 %814
        %817 = vset.pattern.permute.xlu0 3
        %818 = vperm.xlu0 %817, %v172
        %v819 = vpop.permute.xlu0 %818
        %821 = vset.pattern.permute.xlu0 3
        %822 = vperm.xlu0 %821, %v173
        %v823 = vpop.permute.xlu0 %822
        %825 = vset.pattern.permute.xlu0 3
        %826 = vperm.xlu0 %825, %v174
        %v827 = vpop.permute.xlu0 %826
        %829 = vset.pattern.permute.xlu0 3
        %830 = vperm.xlu0 %829, %v175
        %v831 = vpop.permute.xlu0 %830
        %833 = vset.pattern.permute.xlu0 3
        %834 = vperm.xlu0 %833, %v176
        %v835 = vpop.permute.xlu0 %834
        %837 = vset.pattern.permute.xlu0 3
        %838 = vperm.xlu0 %837, %v177
        %v839 = vpop.permute.xlu0 %838
        %841 = vset.pattern.permute.xlu0 3
        %842 = vperm.xlu0 %841, %v178
        %v843 = vpop.permute.xlu0 %842
        %845 = vset.pattern.permute.xlu0 3
        %846 = vperm.xlu0 %845, %v179
        %v847 = vpop.permute.xlu0 %846
        %849 = vset.pattern.permute.xlu0 3
        %850 = vperm.xlu0 %849, %v180
        %v851 = vpop.permute.xlu0 %850
        %853 = vset.pattern.permute.xlu0 3
        %854 = vperm.xlu0 %853, %v181
        %v855 = vpop.permute.xlu0 %854
        %857 = vset.pattern.permute.xlu0 3
        %858 = vperm.xlu0 %857, %v182
        %v859 = vpop.permute.xlu0 %858
        %861 = vset.pattern.permute.xlu0 3
        %862 = vperm.xlu0 %861, %v183
        %v863 = vpop.permute.xlu0 %862
        %865 = vset.pattern.permute.xlu0 3
        %866 = vperm.xlu0 %865, %v184
        %v867 = vpop.permute.xlu0 %866
        %869 = vset.pattern.permute.xlu0 3
        %870 = vperm.xlu0 %869, %v185
        %v871 = vpop.permute.xlu0 %870
        %873 = vset.pattern.permute.xlu0 3
        %874 = vperm.xlu0 %873, %v186
        %v875 = vpop.permute.xlu0 %874
        %877 = vset.pattern.permute.xlu0 3
        %878 = vperm.xlu0 %877, %v187
        %v879 = vpop.permute.xlu0 %878
        %881 = vset.pattern.permute.xlu0 3
        %882 = vperm.xlu0 %881, %v188
        %v883 = vpop.permute.xlu0 %882
        %885 = vset.pattern.permute.xlu0 3
        %886 = vperm.xlu0 %885, %v189
        %v887 = vpop.permute.xlu0 %886
        %889 = vset.pattern.permute.xlu0 3
        %890 = vperm.xlu0 %889, %v190
        %v891 = vpop.permute.xlu0 %890
        %893 = vset.pattern.permute.xlu0 3
        %894 = vperm.xlu0 %893, %v191
        %v895 = vpop.permute.xlu0 %894
        %897 = vset.pattern.permute.xlu0 3
        %898 = vperm.xlu0 %897, %v192
        %v899 = vpop.permute.xlu0 %898
        %901 = vset.pattern.permute.xlu0 3
        %902 = vperm.xlu0 %901, %v193
        %v903 = vpop.permute.xlu0 %902
        %905 = vset.pattern.permute.xlu0 3
        %906 = vperm.xlu0 %905, %v194
        %v907 = vpop.permute.xlu0 %906
        %909 = vset.pattern.permute.xlu0 3
        %910 = vperm.xlu0 %909, %v195
        %v911 = vpop.permute.xlu0 %910
        %913 = vset.pattern.permute.xlu0 3
        %914 = vperm.xlu0 %913, %v196
        %v915 = vpop.permute.xlu0 %914
        %v917 = vsel %vm787, %v791, %v855
        %v918 = vsel %vm788, %v791, %v855
        %v919 = vsel %vm787, %v795, %v859
        %v920 = vsel %vm788, %v795, %v859
        %v921 = vsel %vm787, %v799, %v863
        %v922 = vsel %vm788, %v799, %v863
        %v923 = vsel %vm787, %v803, %v867
        %v924 = vsel %vm788, %v803, %v867
        %v925 = vsel %vm787, %v807, %v871
        %v926 = vsel %vm788, %v807, %v871
        %v927 = vsel %vm787, %v811, %v875
        %v928 = vsel %vm788, %v811, %v875
        %v929 = vsel %vm787, %v815, %v879
        %v930 = vsel %vm788, %v815, %v879
        %v931 = vsel %vm787, %v819, %v883
        %v932 = vsel %vm788, %v819, %v883
        %v933 = vsel %vm787, %v823, %v887
        %v934 = vsel %vm788, %v823, %v887
        %v935 = vsel %vm787, %v827, %v891
        %v936 = vsel %vm788, %v827, %v891
        %v937 = vsel %vm787, %v831, %v895
        %v938 = vsel %vm788, %v831, %v895
        %v939 = vsel %vm787, %v835, %v899
        %v940 = vsel %vm788, %v835, %v899
        %v941 = vsel %vm787, %v839, %v903
        %v942 = vsel %vm788, %v839, %v903
        %v943 = vsel %vm787, %v843, %v907
        %v944 = vsel %vm788, %v843, %v907
        %v945 = vsel %vm787, %v847, %v911
        %v946 = vsel %vm788, %v847, %v911
        %v947 = vsel %vm787, %v851, %v915
        %v948 = vsel %vm788, %v851, %v915
        %v949 = vmul.f32 %v753, %v917
        %v950 = vmul.f32 %v754, %v918
        %v951 = vmul.f32 %v755, %v919
        %v952 = vmul.f32 %v756, %v920
        %v953 = vmul.f32 %v757, %v921
        %v954 = vmul.f32 %v758, %v922
        %v955 = vmul.f32 %v759, %v923
        %v956 = vmul.f32 %v760, %v924
        %v957 = vmul.f32 %v761, %v925
        %v958 = vmul.f32 %v762, %v926
        %v959 = vmul.f32 %v763, %v927
        %v960 = vmul.f32 %v764, %v928
        %v961 = vmul.f32 %v765, %v929
        %v962 = vmul.f32 %v766, %v930
        %v963 = vmul.f32 %v767, %v931
        %v964 = vmul.f32 %v768, %v932
        %v965 = vmul.f32 %v769, %v933
        %v966 = vmul.f32 %v770, %v934
        %v967 = vmul.f32 %v771, %v935
        %v968 = vmul.f32 %v772, %v936
        %v969 = vmul.f32 %v773, %v937
        %v970 = vmul.f32 %v774, %v938
        %v971 = vmul.f32 %v775, %v939
        %v972 = vmul.f32 %v776, %v940
        %v973 = vmul.f32 %v777, %v941
        %v974 = vmul.f32 %v778, %v942
        %v975 = vmul.f32 %v779, %v943
        %v976 = vmul.f32 %v780, %v944
        %v977 = vmul.f32 %v781, %v945
        %v978 = vmul.f32 %v782, %v946
        %v979 = vmul.f32 %v783, %v947
        %v980 = vmul.f32 %v784, %v948
        %v981 = vsel %vm134, 1, 0
        %v982 = vsel %vm135, 1, 0
        %vm983 = vcmp.eq.s32.totalorder %v981, 1
        %vm984 = vcmp.eq.s32.totalorder %v982, 1
        %985 = vset.pattern.permute.xlu0 4
        %986 = vperm.xlu0 %985, %v165
        %v987 = vpop.permute.xlu0 %986
        %989 = vset.pattern.permute.xlu0 4
        %990 = vperm.xlu0 %989, %v166
        %v991 = vpop.permute.xlu0 %990
        %993 = vset.pattern.permute.xlu0 4
        %994 = vperm.xlu0 %993, %v167
        %v995 = vpop.permute.xlu0 %994
        %997 = vset.pattern.permute.xlu0 4
        %998 = vperm.xlu0 %997, %v168
        %v999 = vpop.permute.xlu0 %998
        %1001 = vset.pattern.permute.xlu0 4
        %1002 = vperm.xlu0 %1001, %v169
        %v1003 = vpop.permute.xlu0 %1002
        %1005 = vset.pattern.permute.xlu0 4
        %1006 = vperm.xlu0 %1005, %v170
        %v1007 = vpop.permute.xlu0 %1006
        %1009 = vset.pattern.permute.xlu0 4
        %1010 = vperm.xlu0 %1009, %v171
        %v1011 = vpop.permute.xlu0 %1010
        %1013 = vset.pattern.permute.xlu0 4
        %1014 = vperm.xlu0 %1013, %v172
        %v1015 = vpop.permute.xlu0 %1014
        %1017 = vset.pattern.permute.xlu0 4
        %1018 = vperm.xlu0 %1017, %v173
        %v1019 = vpop.permute.xlu0 %1018
        %1021 = vset.pattern.permute.xlu0 4
        %1022 = vperm.xlu0 %1021, %v174
        %v1023 = vpop.permute.xlu0 %1022
        %1025 = vset.pattern.permute.xlu0 4
        %1026 = vperm.xlu0 %1025, %v175
        %v1027 = vpop.permute.xlu0 %1026
        %1029 = vset.pattern.permute.xlu0 4
        %1030 = vperm.xlu0 %1029, %v176
        %v1031 = vpop.permute.xlu0 %1030
        %1033 = vset.pattern.permute.xlu0 4
        %1034 = vperm.xlu0 %1033, %v177
        %v1035 = vpop.permute.xlu0 %1034
        %1037 = vset.pattern.permute.xlu0 4
        %1038 = vperm.xlu0 %1037, %v178
        %v1039 = vpop.permute.xlu0 %1038
        %1041 = vset.pattern.permute.xlu0 4
        %1042 = vperm.xlu0 %1041, %v179
        %v1043 = vpop.permute.xlu0 %1042
        %1045 = vset.pattern.permute.xlu0 4
        %1046 = vperm.xlu0 %1045, %v180
        %v1047 = vpop.permute.xlu0 %1046
        %1049 = vset.pattern.permute.xlu0 4
        %1050 = vperm.xlu0 %1049, %v181
        %v1051 = vpop.permute.xlu0 %1050
        %1053 = vset.pattern.permute.xlu0 4
        %1054 = vperm.xlu0 %1053, %v182
        %v1055 = vpop.permute.xlu0 %1054
        %1057 = vset.pattern.permute.xlu0 4
        %1058 = vperm.xlu0 %1057, %v183
        %v1059 = vpop.permute.xlu0 %1058
        %1061 = vset.pattern.permute.xlu0 4
        %1062 = vperm.xlu0 %1061, %v184
        %v1063 = vpop.permute.xlu0 %1062
        %1065 = vset.pattern.permute.xlu0 4
        %1066 = vperm.xlu0 %1065, %v185
        %v1067 = vpop.permute.xlu0 %1066
        %1069 = vset.pattern.permute.xlu0 4
        %1070 = vperm.xlu0 %1069, %v186
        %v1071 = vpop.permute.xlu0 %1070
        %1073 = vset.pattern.permute.xlu0 4
        %1074 = vperm.xlu0 %1073, %v187
        %v1075 = vpop.permute.xlu0 %1074
        %1077 = vset.pattern.permute.xlu0 4
        %1078 = vperm.xlu0 %1077, %v188
        %v1079 = vpop.permute.xlu0 %1078
        %1081 = vset.pattern.permute.xlu0 4
        %1082 = vperm.xlu0 %1081, %v189
        %v1083 = vpop.permute.xlu0 %1082
        %1085 = vset.pattern.permute.xlu0 4
        %1086 = vperm.xlu0 %1085, %v190
        %v1087 = vpop.permute.xlu0 %1086
        %1089 = vset.pattern.permute.xlu0 4
        %1090 = vperm.xlu0 %1089, %v191
        %v1091 = vpop.permute.xlu0 %1090
        %1093 = vset.pattern.permute.xlu0 4
        %1094 = vperm.xlu0 %1093, %v192
        %v1095 = vpop.permute.xlu0 %1094
        %1097 = vset.pattern.permute.xlu0 4
        %1098 = vperm.xlu0 %1097, %v193
        %v1099 = vpop.permute.xlu0 %1098
        %1101 = vset.pattern.permute.xlu0 4
        %1102 = vperm.xlu0 %1101, %v194
        %v1103 = vpop.permute.xlu0 %1102
        %1105 = vset.pattern.permute.xlu0 4
        %1106 = vperm.xlu0 %1105, %v195
        %v1107 = vpop.permute.xlu0 %1106
        %1109 = vset.pattern.permute.xlu0 4
        %1110 = vperm.xlu0 %1109, %v196
        %v1111 = vpop.permute.xlu0 %1110
        %v1113 = vsel %vm983, %v987, %v1051
        %v1114 = vsel %vm984, %v987, %v1051
        %v1115 = vsel %vm983, %v991, %v1055
        %v1116 = vsel %vm984, %v991, %v1055
        %v1117 = vsel %vm983, %v995, %v1059
        %v1118 = vsel %vm984, %v995, %v1059
        %v1119 = vsel %vm983, %v999, %v1063
        %v1120 = vsel %vm984, %v999, %v1063
        %v1121 = vsel %vm983, %v1003, %v1067
        %v1122 = vsel %vm984, %v1003, %v1067
        %v1123 = vsel %vm983, %v1007, %v1071
        %v1124 = vsel %vm984, %v1007, %v1071
        %v1125 = vsel %vm983, %v1011, %v1075
        %v1126 = vsel %vm984, %v1011, %v1075
        %v1127 = vsel %vm983, %v1015, %v1079
        %v1128 = vsel %vm984, %v1015, %v1079
        %v1129 = vsel %vm983, %v1019, %v1083
        %v1130 = vsel %vm984, %v1019, %v1083
        %v1131 = vsel %vm983, %v1023, %v1087
        %v1132 = vsel %vm984, %v1023, %v1087
        %v1133 = vsel %vm983, %v1027, %v1091
        %v1134 = vsel %vm984, %v1027, %v1091
        %v1135 = vsel %vm983, %v1031, %v1095
        %v1136 = vsel %vm984, %v1031, %v1095
        %v1137 = vsel %vm983, %v1035, %v1099
        %v1138 = vsel %vm984, %v1035, %v1099
        %v1139 = vsel %vm983, %v1039, %v1103
        %v1140 = vsel %vm984, %v1039, %v1103
        %v1141 = vsel %vm983, %v1043, %v1107
        %v1142 = vsel %vm984, %v1043, %v1107
        %v1143 = vsel %vm983, %v1047, %v1111
        %v1144 = vsel %vm984, %v1047, %v1111
        %v1145 = vmul.f32 %v949, %v1113
        %v1146 = vmul.f32 %v950, %v1114
        %v1147 = vmul.f32 %v951, %v1115
        %v1148 = vmul.f32 %v952, %v1116
        %v1149 = vmul.f32 %v953, %v1117
        %v1150 = vmul.f32 %v954, %v1118
        %v1151 = vmul.f32 %v955, %v1119
        %v1152 = vmul.f32 %v956, %v1120
        %v1153 = vmul.f32 %v957, %v1121
        %v1154 = vmul.f32 %v958, %v1122
        %v1155 = vmul.f32 %v959, %v1123
        %v1156 = vmul.f32 %v960, %v1124
        %v1157 = vmul.f32 %v961, %v1125
        %v1158 = vmul.f32 %v962, %v1126
        %v1159 = vmul.f32 %v963, %v1127
        %v1160 = vmul.f32 %v964, %v1128
        %v1161 = vmul.f32 %v965, %v1129
        %v1162 = vmul.f32 %v966, %v1130
        %v1163 = vmul.f32 %v967, %v1131
        %v1164 = vmul.f32 %v968, %v1132
        %v1165 = vmul.f32 %v969, %v1133
        %v1166 = vmul.f32 %v970, %v1134
        %v1167 = vmul.f32 %v971, %v1135
        %v1168 = vmul.f32 %v972, %v1136
        %v1169 = vmul.f32 %v973, %v1137
        %v1170 = vmul.f32 %v974, %v1138
        %v1171 = vmul.f32 %v975, %v1139
        %v1172 = vmul.f32 %v976, %v1140
        %v1173 = vmul.f32 %v977, %v1141
        %v1174 = vmul.f32 %v978, %v1142
        %v1175 = vmul.f32 %v979, %v1143
        %v1176 = vmul.f32 %v980, %v1144
        %v1177 = vsel %vm138, 1, 0
        %v1178 = vsel %vm139, 1, 0
        %vm1179 = vcmp.eq.s32.totalorder %v1177, 1
        %vm1180 = vcmp.eq.s32.totalorder %v1178, 1
        %1181 = vset.pattern.permute.xlu0 5
        %1182 = vperm.xlu0 %1181, %v165
        %v1183 = vpop.permute.xlu0 %1182
        %1185 = vset.pattern.permute.xlu0 5
        %1186 = vperm.xlu0 %1185, %v166
        %v1187 = vpop.permute.xlu0 %1186
        %1189 = vset.pattern.permute.xlu0 5
        %1190 = vperm.xlu0 %1189, %v167
        %v1191 = vpop.permute.xlu0 %1190
        %1193 = vset.pattern.permute.xlu0 5
        %1194 = vperm.xlu0 %1193, %v168
        %v1195 = vpop.permute.xlu0 %1194
        %1197 = vset.pattern.permute.xlu0 5
        %1198 = vperm.xlu0 %1197, %v169
        %v1199 = vpop.permute.xlu0 %1198
        %1201 = vset.pattern.permute.xlu0 5
        %1202 = vperm.xlu0 %1201, %v170
        %v1203 = vpop.permute.xlu0 %1202
        %1205 = vset.pattern.permute.xlu0 5
        %1206 = vperm.xlu0 %1205, %v171
        %v1207 = vpop.permute.xlu0 %1206
        %1209 = vset.pattern.permute.xlu0 5
        %1210 = vperm.xlu0 %1209, %v172
        %v1211 = vpop.permute.xlu0 %1210
        %1213 = vset.pattern.permute.xlu0 5
        %1214 = vperm.xlu0 %1213, %v173
        %v1215 = vpop.permute.xlu0 %1214
        %1217 = vset.pattern.permute.xlu0 5
        %1218 = vperm.xlu0 %1217, %v174
        %v1219 = vpop.permute.xlu0 %1218
        %1221 = vset.pattern.permute.xlu0 5
        %1222 = vperm.xlu0 %1221, %v175
        %v1223 = vpop.permute.xlu0 %1222
        %1225 = vset.pattern.permute.xlu0 5
        %1226 = vperm.xlu0 %1225, %v176
        %v1227 = vpop.permute.xlu0 %1226
        %1229 = vset.pattern.permute.xlu0 5
        %1230 = vperm.xlu0 %1229, %v177
        %v1231 = vpop.permute.xlu0 %1230
        %1233 = vset.pattern.permute.xlu0 5
        %1234 = vperm.xlu0 %1233, %v178
        %v1235 = vpop.permute.xlu0 %1234
        %1237 = vset.pattern.permute.xlu0 5
        %1238 = vperm.xlu0 %1237, %v179
        %v1239 = vpop.permute.xlu0 %1238
        %1241 = vset.pattern.permute.xlu0 5
        %1242 = vperm.xlu0 %1241, %v180
        %v1243 = vpop.permute.xlu0 %1242
        %1245 = vset.pattern.permute.xlu0 5
        %1246 = vperm.xlu0 %1245, %v181
        %v1247 = vpop.permute.xlu0 %1246
        %1249 = vset.pattern.permute.xlu0 5
        %1250 = vperm.xlu0 %1249, %v182
        %v1251 = vpop.permute.xlu0 %1250
        %1253 = vset.pattern.permute.xlu0 5
        %1254 = vperm.xlu0 %1253, %v183
        %v1255 = vpop.permute.xlu0 %1254
        %1257 = vset.pattern.permute.xlu0 5
        %1258 = vperm.xlu0 %1257, %v184
        %v1259 = vpop.permute.xlu0 %1258
        %1261 = vset.pattern.permute.xlu0 5
        %1262 = vperm.xlu0 %1261, %v185
        %v1263 = vpop.permute.xlu0 %1262
        %1265 = vset.pattern.permute.xlu0 5
        %1266 = vperm.xlu0 %1265, %v186
        %v1267 = vpop.permute.xlu0 %1266
        %1269 = vset.pattern.permute.xlu0 5
        %1270 = vperm.xlu0 %1269, %v187
        %v1271 = vpop.permute.xlu0 %1270
        %1273 = vset.pattern.permute.xlu0 5
        %1274 = vperm.xlu0 %1273, %v188
        %v1275 = vpop.permute.xlu0 %1274
        %1277 = vset.pattern.permute.xlu0 5
        %1278 = vperm.xlu0 %1277, %v189
        %v1279 = vpop.permute.xlu0 %1278
        %1281 = vset.pattern.permute.xlu0 5
        %1282 = vperm.xlu0 %1281, %v190
        %v1283 = vpop.permute.xlu0 %1282
        %1285 = vset.pattern.permute.xlu0 5
        %1286 = vperm.xlu0 %1285, %v191
        %v1287 = vpop.permute.xlu0 %1286
        %1289 = vset.pattern.permute.xlu0 5
        %1290 = vperm.xlu0 %1289, %v192
        %v1291 = vpop.permute.xlu0 %1290
        %1293 = vset.pattern.permute.xlu0 5
        %1294 = vperm.xlu0 %1293, %v193
        %v1295 = vpop.permute.xlu0 %1294
        %1297 = vset.pattern.permute.xlu0 5
        %1298 = vperm.xlu0 %1297, %v194
        %v1299 = vpop.permute.xlu0 %1298
        %1301 = vset.pattern.permute.xlu0 5
        %1302 = vperm.xlu0 %1301, %v195
        %v1303 = vpop.permute.xlu0 %1302
        %1305 = vset.pattern.permute.xlu0 5
        %1306 = vperm.xlu0 %1305, %v196
        %v1307 = vpop.permute.xlu0 %1306
        %v1309 = vsel %vm1179, %v1183, %v1247
        %v1310 = vsel %vm1180, %v1183, %v1247
        %v1311 = vsel %vm1179, %v1187, %v1251
        %v1312 = vsel %vm1180, %v1187, %v1251
        %v1313 = vsel %vm1179, %v1191, %v1255
        %v1314 = vsel %vm1180, %v1191, %v1255
        %v1315 = vsel %vm1179, %v1195, %v1259
        %v1316 = vsel %vm1180, %v1195, %v1259
        %v1317 = vsel %vm1179, %v1199, %v1263
        %v1318 = vsel %vm1180, %v1199, %v1263
        %v1319 = vsel %vm1179, %v1203, %v1267
        %v1320 = vsel %vm1180, %v1203, %v1267
        %v1321 = vsel %vm1179, %v1207, %v1271
        %v1322 = vsel %vm1180, %v1207, %v1271
        %v1323 = vsel %vm1179, %v1211, %v1275
        %v1324 = vsel %vm1180, %v1211, %v1275
        %v1325 = vsel %vm1179, %v1215, %v1279
        %v1326 = vsel %vm1180, %v1215, %v1279
        %v1327 = vsel %vm1179, %v1219, %v1283
        %v1328 = vsel %vm1180, %v1219, %v1283
        %v1329 = vsel %vm1179, %v1223, %v1287
        %v1330 = vsel %vm1180, %v1223, %v1287
        %v1331 = vsel %vm1179, %v1227, %v1291
        %v1332 = vsel %vm1180, %v1227, %v1291
        %v1333 = vsel %vm1179, %v1231, %v1295
        %v1334 = vsel %vm1180, %v1231, %v1295
        %v1335 = vsel %vm1179, %v1235, %v1299
        %v1336 = vsel %vm1180, %v1235, %v1299
        %v1337 = vsel %vm1179, %v1239, %v1303
        %v1338 = vsel %vm1180, %v1239, %v1303
        %v1339 = vsel %vm1179, %v1243, %v1307
        %v1340 = vsel %vm1180, %v1243, %v1307
        %v1341 = vmul.f32 %v1145, %v1309
        %v1342 = vmul.f32 %v1146, %v1310
        %v1343 = vmul.f32 %v1147, %v1311
        %v1344 = vmul.f32 %v1148, %v1312
        %v1345 = vmul.f32 %v1149, %v1313
        %v1346 = vmul.f32 %v1150, %v1314
        %v1347 = vmul.f32 %v1151, %v1315
        %v1348 = vmul.f32 %v1152, %v1316
        %v1349 = vmul.f32 %v1153, %v1317
        %v1350 = vmul.f32 %v1154, %v1318
        %v1351 = vmul.f32 %v1155, %v1319
        %v1352 = vmul.f32 %v1156, %v1320
        %v1353 = vmul.f32 %v1157, %v1321
        %v1354 = vmul.f32 %v1158, %v1322
        %v1355 = vmul.f32 %v1159, %v1323
        %v1356 = vmul.f32 %v1160, %v1324
        %v1357 = vmul.f32 %v1161, %v1325
        %v1358 = vmul.f32 %v1162, %v1326
        %v1359 = vmul.f32 %v1163, %v1327
        %v1360 = vmul.f32 %v1164, %v1328
        %v1361 = vmul.f32 %v1165, %v1329
        %v1362 = vmul.f32 %v1166, %v1330
        %v1363 = vmul.f32 %v1167, %v1331
        %v1364 = vmul.f32 %v1168, %v1332
        %v1365 = vmul.f32 %v1169, %v1333
        %v1366 = vmul.f32 %v1170, %v1334
        %v1367 = vmul.f32 %v1171, %v1335
        %v1368 = vmul.f32 %v1172, %v1336
        %v1369 = vmul.f32 %v1173, %v1337
        %v1370 = vmul.f32 %v1174, %v1338
        %v1371 = vmul.f32 %v1175, %v1339
        %v1372 = vmul.f32 %v1176, %v1340
        %v1373 = vsel %vm142, 1, 0
        %v1374 = vsel %vm143, 1, 0
        %vm1375 = vcmp.eq.s32.totalorder %v1373, 1
        %vm1376 = vcmp.eq.s32.totalorder %v1374, 1
        %1377 = vset.pattern.permute.xlu0 6
        %1378 = vperm.xlu0 %1377, %v165
        %v1379 = vpop.permute.xlu0 %1378
        %1381 = vset.pattern.permute.xlu0 6
        %1382 = vperm.xlu0 %1381, %v166
        %v1383 = vpop.permute.xlu0 %1382
        %1385 = vset.pattern.permute.xlu0 6
        %1386 = vperm.xlu0 %1385, %v167
        %v1387 = vpop.permute.xlu0 %1386
        %1389 = vset.pattern.permute.xlu0 6
        %1390 = vperm.xlu0 %1389, %v168
        %v1391 = vpop.permute.xlu0 %1390
        %1393 = vset.pattern.permute.xlu0 6
        %1394 = vperm.xlu0 %1393, %v169
        %v1395 = vpop.permute.xlu0 %1394
        %1397 = vset.pattern.permute.xlu0 6
        %1398 = vperm.xlu0 %1397, %v170
        %v1399 = vpop.permute.xlu0 %1398
        %1401 = vset.pattern.permute.xlu0 6
        %1402 = vperm.xlu0 %1401, %v171
        %v1403 = vpop.permute.xlu0 %1402
        %1405 = vset.pattern.permute.xlu0 6
        %1406 = vperm.xlu0 %1405, %v172
        %v1407 = vpop.permute.xlu0 %1406
        %1409 = vset.pattern.permute.xlu0 6
        %1410 = vperm.xlu0 %1409, %v173
        %v1411 = vpop.permute.xlu0 %1410
        %1413 = vset.pattern.permute.xlu0 6
        %1414 = vperm.xlu0 %1413, %v174
        %v1415 = vpop.permute.xlu0 %1414
        %1417 = vset.pattern.permute.xlu0 6
        %1418 = vperm.xlu0 %1417, %v175
        %v1419 = vpop.permute.xlu0 %1418
        %1421 = vset.pattern.permute.xlu0 6
        %1422 = vperm.xlu0 %1421, %v176
        %v1423 = vpop.permute.xlu0 %1422
        %1425 = vset.pattern.permute.xlu0 6
        %1426 = vperm.xlu0 %1425, %v177
        %v1427 = vpop.permute.xlu0 %1426
        %1429 = vset.pattern.permute.xlu0 6
        %1430 = vperm.xlu0 %1429, %v178
        %v1431 = vpop.permute.xlu0 %1430
        %1433 = vset.pattern.permute.xlu0 6
        %1434 = vperm.xlu0 %1433, %v179
        %v1435 = vpop.permute.xlu0 %1434
        %1437 = vset.pattern.permute.xlu0 6
        %1438 = vperm.xlu0 %1437, %v180
        %v1439 = vpop.permute.xlu0 %1438
        %1441 = vset.pattern.permute.xlu0 6
        %1442 = vperm.xlu0 %1441, %v181
        %v1443 = vpop.permute.xlu0 %1442
        %1445 = vset.pattern.permute.xlu0 6
        %1446 = vperm.xlu0 %1445, %v182
        %v1447 = vpop.permute.xlu0 %1446
        %1449 = vset.pattern.permute.xlu0 6
        %1450 = vperm.xlu0 %1449, %v183
        %v1451 = vpop.permute.xlu0 %1450
        %1453 = vset.pattern.permute.xlu0 6
        %1454 = vperm.xlu0 %1453, %v184
        %v1455 = vpop.permute.xlu0 %1454
        %1457 = vset.pattern.permute.xlu0 6
        %1458 = vperm.xlu0 %1457, %v185
        %v1459 = vpop.permute.xlu0 %1458
        %1461 = vset.pattern.permute.xlu0 6
        %1462 = vperm.xlu0 %1461, %v186
        %v1463 = vpop.permute.xlu0 %1462
        %1465 = vset.pattern.permute.xlu0 6
        %1466 = vperm.xlu0 %1465, %v187
        %v1467 = vpop.permute.xlu0 %1466
        %1469 = vset.pattern.permute.xlu0 6
        %1470 = vperm.xlu0 %1469, %v188
        %v1471 = vpop.permute.xlu0 %1470
        %1473 = vset.pattern.permute.xlu0 6
        %1474 = vperm.xlu0 %1473, %v189
        %v1475 = vpop.permute.xlu0 %1474
        %1477 = vset.pattern.permute.xlu0 6
        %1478 = vperm.xlu0 %1477, %v190
        %v1479 = vpop.permute.xlu0 %1478
        %1481 = vset.pattern.permute.xlu0 6
        %1482 = vperm.xlu0 %1481, %v191
        %v1483 = vpop.permute.xlu0 %1482
        %1485 = vset.pattern.permute.xlu0 6
        %1486 = vperm.xlu0 %1485, %v192
        %v1487 = vpop.permute.xlu0 %1486
        %1489 = vset.pattern.permute.xlu0 6
        %1490 = vperm.xlu0 %1489, %v193
        %v1491 = vpop.permute.xlu0 %1490
        %1493 = vset.pattern.permute.xlu0 6
        %1494 = vperm.xlu0 %1493, %v194
        %v1495 = vpop.permute.xlu0 %1494
        %1497 = vset.pattern.permute.xlu0 6
        %1498 = vperm.xlu0 %1497, %v195
        %v1499 = vpop.permute.xlu0 %1498
        %1501 = vset.pattern.permute.xlu0 6
        %1502 = vperm.xlu0 %1501, %v196
        %v1503 = vpop.permute.xlu0 %1502
        %v1505 = vsel %vm1375, %v1379, %v1443
        %v1506 = vsel %vm1376, %v1379, %v1443
        %v1507 = vsel %vm1375, %v1383, %v1447
        %v1508 = vsel %vm1376, %v1383, %v1447
        %v1509 = vsel %vm1375, %v1387, %v1451
        %v1510 = vsel %vm1376, %v1387, %v1451
        %v1511 = vsel %vm1375, %v1391, %v1455
        %v1512 = vsel %vm1376, %v1391, %v1455
        %v1513 = vsel %vm1375, %v1395, %v1459
        %v1514 = vsel %vm1376, %v1395, %v1459
        %v1515 = vsel %vm1375, %v1399, %v1463
        %v1516 = vsel %vm1376, %v1399, %v1463
        %v1517 = vsel %vm1375, %v1403, %v1467
        %v1518 = vsel %vm1376, %v1403, %v1467
        %v1519 = vsel %vm1375, %v1407, %v1471
        %v1520 = vsel %vm1376, %v1407, %v1471
        %v1521 = vsel %vm1375, %v1411, %v1475
        %v1522 = vsel %vm1376, %v1411, %v1475
        %v1523 = vsel %vm1375, %v1415, %v1479
        %v1524 = vsel %vm1376, %v1415, %v1479
        %v1525 = vsel %vm1375, %v1419, %v1483
        %v1526 = vsel %vm1376, %v1419, %v1483
        %v1527 = vsel %vm1375, %v1423, %v1487
        %v1528 = vsel %vm1376, %v1423, %v1487
        %v1529 = vsel %vm1375, %v1427, %v1491
        %v1530 = vsel %vm1376, %v1427, %v1491
        %v1531 = vsel %vm1375, %v1431, %v1495
        %v1532 = vsel %vm1376, %v1431, %v1495
        %v1533 = vsel %vm1375, %v1435, %v1499
        %v1534 = vsel %vm1376, %v1435, %v1499
        %v1535 = vsel %vm1375, %v1439, %v1503
        %v1536 = vsel %vm1376, %v1439, %v1503
        %v1537 = vmul.f32 %v1341, %v1505
        %v1538 = vmul.f32 %v1342, %v1506
        %v1539 = vmul.f32 %v1343, %v1507
        %v1540 = vmul.f32 %v1344, %v1508
        %v1541 = vmul.f32 %v1345, %v1509
        %v1542 = vmul.f32 %v1346, %v1510
        %v1543 = vmul.f32 %v1347, %v1511
        %v1544 = vmul.f32 %v1348, %v1512
        %v1545 = vmul.f32 %v1349, %v1513
        %v1546 = vmul.f32 %v1350, %v1514
        %v1547 = vmul.f32 %v1351, %v1515
        %v1548 = vmul.f32 %v1352, %v1516
        %v1549 = vmul.f32 %v1353, %v1517
        %v1550 = vmul.f32 %v1354, %v1518
        %v1551 = vmul.f32 %v1355, %v1519
        %v1552 = vmul.f32 %v1356, %v1520
        %v1553 = vmul.f32 %v1357, %v1521
        %v1554 = vmul.f32 %v1358, %v1522
        %v1555 = vmul.f32 %v1359, %v1523
        %v1556 = vmul.f32 %v1360, %v1524
        %v1557 = vmul.f32 %v1361, %v1525
        %v1558 = vmul.f32 %v1362, %v1526
        %v1559 = vmul.f32 %v1363, %v1527
        %v1560 = vmul.f32 %v1364, %v1528
        %v1561 = vmul.f32 %v1365, %v1529
        %v1562 = vmul.f32 %v1366, %v1530
        %v1563 = vmul.f32 %v1367, %v1531
        %v1564 = vmul.f32 %v1368, %v1532
        %v1565 = vmul.f32 %v1369, %v1533
        %v1566 = vmul.f32 %v1370, %v1534
        %v1567 = vmul.f32 %v1371, %v1535
        %v1568 = vmul.f32 %v1372, %v1536
        %v1569 = vsel %vm146, 1, 0
        %v1570 = vsel %vm147, 1, 0
        %vm1571 = vcmp.eq.s32.totalorder %v1569, 1
        %vm1572 = vcmp.eq.s32.totalorder %v1570, 1
        %1573 = vset.pattern.permute.xlu0 7
        %1574 = vperm.xlu0 %1573, %v165
        %v1575 = vpop.permute.xlu0 %1574
        %1577 = vset.pattern.permute.xlu0 7
        %1578 = vperm.xlu0 %1577, %v166
        %v1579 = vpop.permute.xlu0 %1578
        %1581 = vset.pattern.permute.xlu0 7
        %1582 = vperm.xlu0 %1581, %v167
        %v1583 = vpop.permute.xlu0 %1582
        %1585 = vset.pattern.permute.xlu0 7
        %1586 = vperm.xlu0 %1585, %v168
        %v1587 = vpop.permute.xlu0 %1586
        %1589 = vset.pattern.permute.xlu0 7
        %1590 = vperm.xlu0 %1589, %v169
        %v1591 = vpop.permute.xlu0 %1590
        %1593 = vset.pattern.permute.xlu0 7
        %1594 = vperm.xlu0 %1593, %v170
        %v1595 = vpop.permute.xlu0 %1594
        %1597 = vset.pattern.permute.xlu0 7
        %1598 = vperm.xlu0 %1597, %v171
        %v1599 = vpop.permute.xlu0 %1598
        %1601 = vset.pattern.permute.xlu0 7
        %1602 = vperm.xlu0 %1601, %v172
        %v1603 = vpop.permute.xlu0 %1602
        %1605 = vset.pattern.permute.xlu0 7
        %1606 = vperm.xlu0 %1605, %v173
        %v1607 = vpop.permute.xlu0 %1606
        %1609 = vset.pattern.permute.xlu0 7
        %1610 = vperm.xlu0 %1609, %v174
        %v1611 = vpop.permute.xlu0 %1610
        %1613 = vset.pattern.permute.xlu0 7
        %1614 = vperm.xlu0 %1613, %v175
        %v1615 = vpop.permute.xlu0 %1614
        %1617 = vset.pattern.permute.xlu0 7
        %1618 = vperm.xlu0 %1617, %v176
        %v1619 = vpop.permute.xlu0 %1618
        %1621 = vset.pattern.permute.xlu0 7
        %1622 = vperm.xlu0 %1621, %v177
        %v1623 = vpop.permute.xlu0 %1622
        %1625 = vset.pattern.permute.xlu0 7
        %1626 = vperm.xlu0 %1625, %v178
        %v1627 = vpop.permute.xlu0 %1626
        %1629 = vset.pattern.permute.xlu0 7
        %1630 = vperm.xlu0 %1629, %v179
        %v1631 = vpop.permute.xlu0 %1630
        %1633 = vset.pattern.permute.xlu0 7
        %1634 = vperm.xlu0 %1633, %v180
        %v1635 = vpop.permute.xlu0 %1634
        %1637 = vset.pattern.permute.xlu0 7
        %1638 = vperm.xlu0 %1637, %v181
        %v1639 = vpop.permute.xlu0 %1638
        %1641 = vset.pattern.permute.xlu0 7
        %1642 = vperm.xlu0 %1641, %v182
        %v1643 = vpop.permute.xlu0 %1642
        %1645 = vset.pattern.permute.xlu0 7
        %1646 = vperm.xlu0 %1645, %v183
        %v1647 = vpop.permute.xlu0 %1646
        %1649 = vset.pattern.permute.xlu0 7
        %1650 = vperm.xlu0 %1649, %v184
        %v1651 = vpop.permute.xlu0 %1650
        %1653 = vset.pattern.permute.xlu0 7
        %1654 = vperm.xlu0 %1653, %v185
        %v1655 = vpop.permute.xlu0 %1654
        %1657 = vset.pattern.permute.xlu0 7
        %1658 = vperm.xlu0 %1657, %v186
        %v1659 = vpop.permute.xlu0 %1658
        %1661 = vset.pattern.permute.xlu0 7
        %1662 = vperm.xlu0 %1661, %v187
        %v1663 = vpop.permute.xlu0 %1662
        %1665 = vset.pattern.permute.xlu0 7
        %1666 = vperm.xlu0 %1665, %v188
        %v1667 = vpop.permute.xlu0 %1666
        %1669 = vset.pattern.permute.xlu0 7
        %1670 = vperm.xlu0 %1669, %v189
        %v1671 = vpop.permute.xlu0 %1670
        %1673 = vset.pattern.permute.xlu0 7
        %1674 = vperm.xlu0 %1673, %v190
        %v1675 = vpop.permute.xlu0 %1674
        %1677 = vset.pattern.permute.xlu0 7
        %1678 = vperm.xlu0 %1677, %v191
        %v1679 = vpop.permute.xlu0 %1678
        %1681 = vset.pattern.permute.xlu0 7
        %1682 = vperm.xlu0 %1681, %v192
        %v1683 = vpop.permute.xlu0 %1682
        %1685 = vset.pattern.permute.xlu0 7
        %1686 = vperm.xlu0 %1685, %v193
        %v1687 = vpop.permute.xlu0 %1686
        %1689 = vset.pattern.permute.xlu0 7
        %1690 = vperm.xlu0 %1689, %v194
        %v1691 = vpop.permute.xlu0 %1690
        %1693 = vset.pattern.permute.xlu0 7
        %1694 = vperm.xlu0 %1693, %v195
        %v1695 = vpop.permute.xlu0 %1694
        %1697 = vset.pattern.permute.xlu0 7
        %1698 = vperm.xlu0 %1697, %v196
        %v1699 = vpop.permute.xlu0 %1698
        %v1701 = vsel %vm1571, %v1575, %v1639
        %v1702 = vsel %vm1572, %v1575, %v1639
        %v1703 = vsel %vm1571, %v1579, %v1643
        %v1704 = vsel %vm1572, %v1579, %v1643
        %v1705 = vsel %vm1571, %v1583, %v1647
        %v1706 = vsel %vm1572, %v1583, %v1647
        %v1707 = vsel %vm1571, %v1587, %v1651
        %v1708 = vsel %vm1572, %v1587, %v1651
        %v1709 = vsel %vm1571, %v1591, %v1655
        %v1710 = vsel %vm1572, %v1591, %v1655
        %v1711 = vsel %vm1571, %v1595, %v1659
        %v1712 = vsel %vm1572, %v1595, %v1659
        %v1713 = vsel %vm1571, %v1599, %v1663
        %v1714 = vsel %vm1572, %v1599, %v1663
        %v1715 = vsel %vm1571, %v1603, %v1667
        %v1716 = vsel %vm1572, %v1603, %v1667
        %v1717 = vsel %vm1571, %v1607, %v1671
        %v1718 = vsel %vm1572, %v1607, %v1671
        %v1719 = vsel %vm1571, %v1611, %v1675
        %v1720 = vsel %vm1572, %v1611, %v1675
        %v1721 = vsel %vm1571, %v1615, %v1679
        %v1722 = vsel %vm1572, %v1615, %v1679
        %v1723 = vsel %vm1571, %v1619, %v1683
        %v1724 = vsel %vm1572, %v1619, %v1683
        %v1725 = vsel %vm1571, %v1623, %v1687
        %v1726 = vsel %vm1572, %v1623, %v1687
        %v1727 = vsel %vm1571, %v1627, %v1691
        %v1728 = vsel %vm1572, %v1627, %v1691
        %v1729 = vsel %vm1571, %v1631, %v1695
        %v1730 = vsel %vm1572, %v1631, %v1695
        %v1731 = vsel %vm1571, %v1635, %v1699
        %v1732 = vsel %vm1572, %v1635, %v1699
        %v1733 = vmul.f32 %v1537, %v1701
        %v1734 = vmul.f32 %v1538, %v1702
        %v1735 = vmul.f32 %v1539, %v1703
        %v1736 = vmul.f32 %v1540, %v1704
        %v1737 = vmul.f32 %v1541, %v1705
        %v1738 = vmul.f32 %v1542, %v1706
        %v1739 = vmul.f32 %v1543, %v1707
        %v1740 = vmul.f32 %v1544, %v1708
        %v1741 = vmul.f32 %v1545, %v1709
        %v1742 = vmul.f32 %v1546, %v1710
        %v1743 = vmul.f32 %v1547, %v1711
        %v1744 = vmul.f32 %v1548, %v1712
        %v1745 = vmul.f32 %v1549, %v1713
        %v1746 = vmul.f32 %v1550, %v1714
        %v1747 = vmul.f32 %v1551, %v1715
        %v1748 = vmul.f32 %v1552, %v1716
        %v1749 = vmul.f32 %v1553, %v1717
        %v1750 = vmul.f32 %v1554, %v1718
        %v1751 = vmul.f32 %v1555, %v1719
        %v1752 = vmul.f32 %v1556, %v1720
        %v1753 = vmul.f32 %v1557, %v1721
        %v1754 = vmul.f32 %v1558, %v1722
        %v1755 = vmul.f32 %v1559, %v1723
        %v1756 = vmul.f32 %v1560, %v1724
        %v1757 = vmul.f32 %v1561, %v1725
        %v1758 = vmul.f32 %v1562, %v1726
        %v1759 = vmul.f32 %v1563, %v1727
        %v1760 = vmul.f32 %v1564, %v1728
        %v1761 = vmul.f32 %v1565, %v1729
        %v1762 = vmul.f32 %v1566, %v1730
        %v1763 = vmul.f32 %v1567, %v1731
        %v1764 = vmul.f32 %v1568, %v1732
        %s1765 = smul.u32 0, 2
        %s1766 = smul.addr %s1765, 8
        %s1767 = scalar_lea.vmem %s107, %s1766 [#allocation2]
        %1768 = vst [vmem:[%s1767] sm:$0xff] %v1733
        %1769 = vst [vmem:[%s1767 + $0x8] sm:$0xff] %v1734
        %1770 = vst [vmem:[%s1767 + $0x10] sm:$0xff] %v1735
        %1771 = vst [vmem:[%s1767 + $0x18] sm:$0xff] %v1736
        %1772 = vst [vmem:[%s1767 + $0x20] sm:$0xff] %v1737
        %1773 = vst [vmem:[%s1767 + $0x28] sm:$0xff] %v1738
        %1774 = vst [vmem:[%s1767 + $0x30] sm:$0xff] %v1739
        %1775 = vst [vmem:[%s1767 + $0x38] sm:$0xff] %v1740
        %1776 = vst [vmem:[%s1767 + $0x40] sm:$0xff] %v1741
        %1777 = vst [vmem:[%s1767 + $0x48] sm:$0xff] %v1742
        %1778 = vst [vmem:[%s1767 + $0x50] sm:$0xff] %v1743
        %1779 = vst [vmem:[%s1767 + $0x58] sm:$0xff] %v1744
        %1780 = vst [vmem:[%s1767 + $0x60] sm:$0xff] %v1745
        %1781 = vst [vmem:[%s1767 + $0x68] sm:$0xff] %v1746
        %1782 = vst [vmem:[%s1767 + $0x70] sm:$0xff] %v1747
        %1783 = vst [vmem:[%s1767 + $0x78] sm:$0xff] %v1748
        %1784 = vst [vmem:[%s1767 + $0x80] sm:$0xff] %v1749
        %1785 = vst [vmem:[%s1767 + $0x88] sm:$0xff] %v1750
        %1786 = vst [vmem:[%s1767 + $0x90] sm:$0xff] %v1751
        %1787 = vst [vmem:[%s1767 + $0x98] sm:$0xff] %v1752
        %1788 = vst [vmem:[%s1767 + $0xa0] sm:$0xff] %v1753
        %1789 = vst [vmem:[%s1767 + $0xa8] sm:$0xff] %v1754
        %1790 = vst [vmem:[%s1767 + $0xb0] sm:$0xff] %v1755
        %1791 = vst [vmem:[%s1767 + $0xb8] sm:$0xff] %v1756
        %1792 = vst [vmem:[%s1767 + $0xc0] sm:$0xff] %v1757
        %1793 = vst [vmem:[%s1767 + $0xc8] sm:$0xff] %v1758
        %1794 = vst [vmem:[%s1767 + $0xd0] sm:$0xff] %v1759
        %1795 = vst [vmem:[%s1767 + $0xd8] sm:$0xff] %v1760
        %1796 = vst [vmem:[%s1767 + $0xe0] sm:$0xff] %v1761
        %1797 = vst [vmem:[%s1767 + $0xe8] sm:$0xff] %v1762
        %1798 = vst [vmem:[%s1767 + $0xf0] sm:$0xff] %v1763
        %1799 = vst [vmem:[%s1767 + $0xf8] sm:$0xff] %v1764
        %s1800 = sand.u32 %s49, 1
        %s1801 = scalar_lea.sflag [#allocation3], %s1800
        %s1802 = sand.u32 %s49, 1
        %s1803 = smul.addr %s1802, 256
        %s1804 = scalar_lea.vmem [#allocation2], %s1803
        // Predicated region
        $region25: #{occupancy_to_topology.1} parent=23 // pred_check
          %p1805 = pneg %p59
        $region26: #{occupancy_to_topology.1} parent=23 // pred_check_branch
          %1807 = sbr.rel (%p1805) target = $region28
        $region27: #{occupancy_to_topology.1} parent=23 // pred_region
          %s1808 = smul.u32 16, %s15
          %s1810 = ssub.s32 4096, 4096
          %1811 = vsyncadd %s1801, %s1810
          %s1812 = smul.addr %s1808, 2
          %s1813 = smul.addr %s1812, 128
          %s1814 = scalar_lea.hbm %s1, %s1813
          %s1815 = sshll.u32 %s1804, 4
          %s1816 = int_to_ptr.vmem [resolvable:$true] %s1815
          %1821 = dma.vmem_to_hbm [thread:$0]  %s1816, 4096, %s1814, %s1801, 256, 256, 16
        $region28: #{occupancy_to_topology.1} parent=23 // pred_fallthru
          _
      $region24: #{occupancy_to_topology.1} parent=5 // pred_fallthru
        _
      %p1822 = scmp.le.s32.totalorder 2, %s10
      // Predicated region
      $region29: #{occupancy_to_topology.1} parent=5 // pred_check
        %p1823 = pneg %p1822
      $region30: #{occupancy_to_topology.1} parent=5 // pred_check_branch
        %1825 = sbr.rel (%p1823) target = $region32
      $region31: #{occupancy_to_topology.1} parent=5 // pred_region
        %s1826 = ssub.s32 %s10, 2
        // Predicated region
        $region33: #{occupancy_to_topology.1} parent=31 // pred_check
          %p1827 = pneg %p65
        $region34: #{occupancy_to_topology.1} parent=31 // pred_check_branch
          %1829 = sbr.rel (%p1827) target = $region36
        $region35: #{occupancy_to_topology.1} parent=31 // pred_region
          %s1830 = sand.u32 %s50, 1
          %s1831 = scalar_lea.sflag [#allocation3], %s1830
          %s1832 = sand.u32 %s50, 1
          %s1833 = smul.addr %s1832, 256
          %s1834 = scalar_lea.vmem [#allocation2], %s1833
          %1835 = dma.done %s1831, 4096
        $region36: #{occupancy_to_topology.1} parent=31 // pred_fallthru
          _
      $region32: #{occupancy_to_topology.1} parent=5 // pred_fallthru
        _
    $region6: #{occupancy_to_topology.1} parent=1 // loop_footer
      %s14 = sadd.s32 1, %s10
    $region7: #{occupancy_to_topology.1} parent=1 // loop_footer_branch
      %9 = sbr.rel target = $region3
    $region8: #{occupancy_to_topology.1} parent=1 // loop_exit
      _
    %1836 = vsyncpa [#allocation3], 1
    %s1837 = scalar_lea.sflag [#allocation3], 1
    %1838 = vsyncpa %s1837, 1

</llo_original>
